<compile_context>
chip_gen: v7x
topology: tpu7x:2x2x1
jax: 0.10.0
libtpu: 0.0.40
codegen_flags: <defaults>
</compile_context>

<pallas_src>
import jax
import jax.numpy as jnp
from jax import lax
from jax.experimental import pallas as pl
from jax.experimental.pallas import tpu as pltpu

# ---- fixed network geometry (matches StockPredictionModel) ------------------
_HIDDEN = (64, 32, 16, 1)          # out_features of fc1, fc2, fc3, output
_ROW_OFF = (0, 64, 96, 112)        # row offset of each layer in the packed slab
_SLAB_ROWS = 120                   # 64 + 32 + 16 + 8 (last layer row-padded to 8)
_SLAB_LANES = 128                  # lane-padded "in" dimension of every layer
_BIAS_LANE = 127                   # bias column; every in_d <= 64 so no clash
_LANE_ALIGN = 256                  # batch-tile alignment (full MXU pass width)
_MAX_TB = 16384                    # batch-tile cap (keeps per-step VMEM small)


def _mlp_kernel(x_ref, w_ref, o_ref):
    """Fused 4-layer MLP.

    x_ref: (tb, F)    f32  natural-layout batch tile
    w_ref: (120, 128) f32  packed weights (PyTorch (out, in)) + bias in lane 127
    o_ref: (1, tb)    f32  lane-dense output tile (batch on lanes)
    """
    x = x_ref[...]                                   # (tb, F)
    feat = x.shape[1]

    def wb(layer, in_d):
        r0, out_d = _ROW_OFF[layer], _HIDDEN[layer]
        w = w_ref[r0:r0 + out_d, :in_d]              # (out_d, in_d) static Ref slice
        b = w_ref[r0:r0 + out_d, _BIAS_LANE:_BIAS_LANE + 1]   # (out_d, 1)
        return w, b

    # Layer 1: fold the x transpose into the matmul:
    #   (64, F) . (tb, F)^T -> (64, tb), batch lands on the lane axis.
    w1, b1 = wb(0, feat)
    h = lax.dot_general(w1, x, (((1,), (1,)), ((), ())),
                        preferred_element_type=jnp.float32) + b1
    h = jnp.maximum(h, 0.0)

    # Layers 2, 3: (out, in) @ (in, tb), still lane-dense in the batch.
    for layer, in_d in ((1, 64), (2, 32)):
        w, b = wb(layer, in_d)
        h = jnp.dot(w, h, preferred_element_type=jnp.float32) + b
        h = jnp.maximum(h, 0.0)

    # Output layer: (1, 16) @ (16, tb) -> (1, tb); unmasked lane-dense store.
    w4, b4 = wb(3, 16)
    o_ref[...] = (jnp.dot(w4, h, preferred_element_type=jnp.float32)
                  + b4).astype(o_ref.dtype)


def pack_params(params, n_features):
    """Pack the four nn.Linear (out, in) weights and their biases into one
    lane-padded f32 slab (weights in lanes [0, in_d), bias in lane 127)."""
    in_dims = (n_features,) + _HIDDEN[:3]
    slab = jnp.zeros((_SLAB_ROWS, _SLAB_LANES), jnp.float32)
    for i in range(4):
        out_d, in_d, r0 = _HIDDEN[i], in_dims[i], _ROW_OFF[i]
        w = params[f"w{i + 1}"].astype(jnp.float32)             # (out_d, in_d)
        b = params[f"b{i + 1}"].astype(jnp.float32).reshape(out_d, 1)
        slab = slab.at[r0:r0 + out_d, :in_d].set(w)
        slab = slab.at[r0:r0 + out_d, _BIAS_LANE:_BIAS_LANE + 1].set(b)
    return slab


def _round_up(n, m):
    return ((n + m - 1) // m) * m


def stock_prediction_forward(x, params, *, max_batch_tile=_MAX_TB):
    """x: (B, F) float32.  params: PyTorch-layout (out, in) weights, (out,) biases.
    Returns (B, 1) float32, matching StockPredictionModel.forward."""
    B, F = x.shape
    assert F < _BIAS_LANE, "feature dim must fit the packed 128-lane slab"

    # Batch tiling: big lane-aligned tiles (amortize the ~600-cycle per-step
    # overhead), and >= 2 grid steps whenever the batch allows so the
    # "parallel" axis can be sharded across v7x's two TensorCores.  On
    # single-TC v5e/v6e the extra step is just a short serial loop.
    tb = _round_up(pl.cdiv(B, 2), _LANE_ALIGN)
    tb = max(_LANE_ALIGN, min(tb, _round_up(max_batch_tile, _LANE_ALIGN)))
    grid = (pl.cdiv(B, tb),)
    Bp = grid[0] * tb            # output is padded; padded columns are sliced off

    w_slab = pack_params(params, F)

    # Advisory cost estimate (x read once at 4 B/elem, slab per step, out write).
    flops = 2 * Bp * (F * 64 + 64 * 32 + 32 * 16 + 16 * 1)
    bytes_accessed = int(x.size * 4 + grid[0] * w_slab.size * 4 + Bp * 4)
    cost = pl.CostEstimate(flops=flops, transcendentals=0,
                           bytes_accessed=bytes_accessed)

    out_t = pl.pallas_call(
        _mlp_kernel,
        out_shape=jax.ShapeDtypeStruct((1, Bp), jnp.float32),
        grid_spec=pltpu.PrefetchScalarGridSpec(
            num_scalar_prefetch=0,
            grid=grid,
            in_specs=[
                pl.BlockSpec((tb, F), lambda i: (i, 0)),        # natural-layout x tile
                pl.BlockSpec(w_slab.shape, lambda i: (0, 0)),   # resident weight+bias slab
            ],
            out_specs=pl.BlockSpec((1, tb), lambda i: (0, i)),  # lane-dense output
        ),
        compiler_params=pltpu.CompilerParams(
            dimension_semantics=("parallel",),
            vmem_limit_bytes=32 * 1024 * 1024),   # > v5e's 16 MiB default scope
        cost_estimate=cost,
    )(x.astype(jnp.float32), w_slab)

    return out_t[0, :B].reshape(B, 1)


def init_params(key, n_features):
    """Deterministic synthetic parameters in PyTorch nn.Linear layout:
    weights (out_features, in_features), biases (out_features,)."""
    in_dims = (n_features,) + _HIDDEN[:3]
    params = {}
    for idx, (fan_in, fan_out) in enumerate(zip(in_dims, _HIDDEN), start=1):
        key, kw, kb = jax.random.split(key, 3)
        bound = 1.0 / (fan_in ** 0.5)   # nn.Linear default init range
        params[f"w{idx}"] = jax.random.uniform(
            kw, (fan_out, fan_in), jnp.float32, -bound, bound)
        params[f"b{idx}"] = jax.random.uniform(
            kb, (fan_out,), jnp.float32, -bound, bound)
    return params


def reference_forward(x, p):
    """Plain-JAX f32 reference with PyTorch semantics (h @ W^T + b)."""
    h = x
    for i in range(1, 5):
        w, b = p[f"w{i}"], p[f"b{i}"]
        h = jnp.dot(h, w.T, preferred_element_type=jnp.float32) + b
        if i < 4:
            h = jnp.maximum(h, 0.0)
    return h


if __name__ == "__main__":
    # TODO(synk): StandardScaler fitting and the training loop live outside
    # Module.forward and are not translated; inputs stand in for scaled rows.
    key = jax.random.PRNGKey(0)
    B, F = 2048, 8   # 8 standardized features (X_train.shape[1]); batch gives
                     # two lane-aligned tiles -> grid = (2,).

    key, kx = jax.random.split(key)
    x = jax.random.normal(kx, (B, F), dtype=jnp.float32)  # StandardScaler-like

    params = init_params(key, F)

    out = stock_prediction_forward(x, params)
    out = jax.block_until_ready(out)
    assert out.shape == (B, 1)

    # f32 end-to-end: should track the f32 reference closely (tolerance covers
    # the MXU's f32 matmul pass decomposition).
    ref = reference_forward(x, params)
    max_err = float(jnp.max(jnp.abs(out - ref)))
    assert jnp.allclose(out, ref, atol=2e-2, rtol=2e-2), max_err

    print("KERNEL_OK")
</pallas_src>

<mosaic_0001>
module attributes {stable_mosaic.version = 11 : i64} {
  func.func @_mlp_kernel(%arg0: i32, %arg1: memref<1024x8xf32, #tpu.memory_space<vmem>>, %arg2: memref<120x128xf32, #tpu.memory_space<vmem>>, %arg3: memref<1x1024xf32, #tpu.memory_space<vmem>>) attributes {dimension_semantics = [#tpu.dimension_semantics<parallel>], iteration_bounds = array<i64: 2>, scalar_prefetch = 0 : i64, scratch_operands = 0 : i64, tpu.core_type = #tpu.core_type<tc>, window_params = [{transform_indices = @transform_0, window_bounds = array<i64: 1024, 8>}, {pipeline_mode = #tpu.pipeline_mode<synchronous>, transform_indices = @transform_1, window_bounds = array<i64: 120, 128>}, {transform_indices = @transform_2, window_bounds = array<i64: 1, 1024>}]} {
    %c0 = arith.constant 0 : index
    %c0_0 = arith.constant 0 : index
    %0 = vector.load %arg1[%c0, %c0_0] : memref<1024x8xf32, #tpu.memory_space<vmem>>, vector<1024x8xf32>
    %c0_1 = arith.constant 0 : index
    %c0_2 = arith.constant 0 : index
    %1 = vector.load %arg2[%c0_1, %c0_2] : memref<120x128xf32, #tpu.memory_space<vmem>>, vector<64x8xf32>
    %c0_3 = arith.constant 0 : index
    %c127 = arith.constant 127 : index
    %2 = vector.load %arg2[%c0_3, %c127] : memref<120x128xf32, #tpu.memory_space<vmem>>, vector<64x1xf32>
    %cst = arith.constant dense<0.000000e+00> : vector<64x1024xf32>
    %3 = tpu.matmul %1, %0, %cst {dimension_numbers = #tpu.dot_dimension_numbers<[1], [1], [0], [0], [0, 0, 1, 0], [], []>} : vector<64x8xf32>, vector<1024x8xf32>, vector<64x1024xf32> -> vector<64x1024xf32>
    %4 = vector.broadcast %2 : vector<64x1xf32> to vector<64x1024xf32>
    %5 = arith.addf %3, %4 : vector<64x1024xf32>
    %cst_4 = arith.constant 0.000000e+00 : f32
    %6 = vector.broadcast %cst_4 : f32 to vector<64x1024xf32>
    %7 = arith.maximumf %5, %6 : vector<64x1024xf32>
    %c64 = arith.constant 64 : index
    %c0_5 = arith.constant 0 : index
    %8 = vector.load %arg2[%c64, %c0_5] : memref<120x128xf32, #tpu.memory_space<vmem>>, vector<32x64xf32>
    %c64_6 = arith.constant 64 : index
    %c127_7 = arith.constant 127 : index
    %9 = vector.load %arg2[%c64_6, %c127_7] : memref<120x128xf32, #tpu.memory_space<vmem>>, vector<32x1xf32>
    %cst_8 = arith.constant dense<0.000000e+00> : vector<32x1024xf32>
    %10 = tpu.matmul %8, %7, %cst_8 {dimension_numbers = #tpu.dot_dimension_numbers<[1], [0], [0], [1], [0, 0, 1, 1], [], []>} : vector<32x64xf32>, vector<64x1024xf32>, vector<32x1024xf32> -> vector<32x1024xf32>
    %11 = vector.broadcast %9 : vector<32x1xf32> to vector<32x1024xf32>
    %12 = arith.addf %10, %11 : vector<32x1024xf32>
    %cst_9 = arith.constant 0.000000e+00 : f32
    %13 = vector.broadcast %cst_9 : f32 to vector<32x1024xf32>
    %14 = arith.maximumf %12, %13 : vector<32x1024xf32>
    %c96 = arith.constant 96 : index
    %c0_10 = arith.constant 0 : index
    %15 = vector.load %arg2[%c96, %c0_10] : memref<120x128xf32, #tpu.memory_space<vmem>>, vector<16x32xf32>
    %c96_11 = arith.constant 96 : index
    %c127_12 = arith.constant 127 : index
    %16 = vector.load %arg2[%c96_11, %c127_12] : memref<120x128xf32, #tpu.memory_space<vmem>>, vector<16x1xf32>
    %cst_13 = arith.constant dense<0.000000e+00> : vector<16x1024xf32>
    %17 = tpu.matmul %15, %14, %cst_13 {dimension_numbers = #tpu.dot_dimension_numbers<[1], [0], [0], [1], [0, 0, 1, 1], [], []>} : vector<16x32xf32>, vector<32x1024xf32>, vector<16x1024xf32> -> vector<16x1024xf32>
    %18 = vector.broadcast %16 : vector<16x1xf32> to vector<16x1024xf32>
    %19 = arith.addf %17, %18 : vector<16x1024xf32>
    %cst_14 = arith.constant 0.000000e+00 : f32
    %20 = vector.broadcast %cst_14 : f32 to vector<16x1024xf32>
    %21 = arith.maximumf %19, %20 : vector<16x1024xf32>
    %c112 = arith.constant 112 : index
    %c0_15 = arith.constant 0 : index
    %22 = vector.load %arg2[%c112, %c0_15] : memref<120x128xf32, #tpu.memory_space<vmem>>, vector<1x16xf32>
    %c112_16 = arith.constant 112 : index
    %c127_17 = arith.constant 127 : index
    %23 = vector.load %arg2[%c112_16, %c127_17] : memref<120x128xf32, #tpu.memory_space<vmem>>, vector<1x1xf32>
    %cst_18 = arith.constant dense<0.000000e+00> : vector<1x1024xf32>
    %24 = tpu.matmul %22, %21, %cst_18 {dimension_numbers = #tpu.dot_dimension_numbers<[1], [0], [0], [1], [0, 0, 1, 1], [], []>} : vector<1x16xf32>, vector<16x1024xf32>, vector<1x1024xf32> -> vector<1x1024xf32>
    %25 = vector.broadcast %23 : vector<1x1xf32> to vector<1x1024xf32>
    %26 = arith.addf %24, %25 : vector<1x1024xf32>
    %c0_19 = arith.constant 0 : index
    %c0_20 = arith.constant 0 : index
    %27 = vector.load %arg3[%c0_19, %c0_20] : memref<1x1024xf32, #tpu.memory_space<vmem>>, vector<1x1024xf32>
    tpu.vector_store %arg3[%c0_19, %c0_20], %26 {strides = array<i32>} : memref<1x1024xf32, #tpu.memory_space<vmem>>, vector<1x1024xf32>,
    return
  }
  func.func @transform_0(%arg0: i32) -> (i32, i32) {
    %c0_i32 = arith.constant 0 : i32
    %c0_i32_0 = arith.constant 0 : i32
    return %arg0, %c0_i32 : i32, i32
  }
  func.func @transform_1(%arg0: i32) -> (i32, i32) {
    %c0_i32 = arith.constant 0 : i32
    %c0_i32_0 = arith.constant 0 : i32
    %c0_i32_1 = arith.constant 0 : i32
    return %c0_i32, %c0_i32_0 : i32, i32
  }
  func.func @transform_2(%arg0: i32) -> (i32, i32) {
    %c0_i32 = arith.constant 0 : i32
    %c0_i32_0 = arith.constant 0 : i32
    return %c0_i32, %arg0 : i32, i32
  }
}

</mosaic_0001>

<llo_original>
// kernel: tpu_custom_call.1
$region0: #{tpu_custom_call.1}
  #allocation0 [shape = 'u32[]', space=smem, size = 0x4, offset = 0x4, fixed_abs, tag = 'smem constant byte address 0x4 - core index']
  #allocation1 [shape = 'u32[144,128]{1,0:T(1,128)}', space=vmem, size = 0x12000, scoped, tag = 'internal scratch']
  %s0 = inlined_call_operand.vmem [shape: f32[2048,8], index: 0, kind: input, shape index: {}]
  %s1 = inlined_call_operand.vmem [shape: f32[120,128], index: 1, kind: input, shape index: {}]
  %s2 = inlined_call_operand.hbm [shape: f32[1,2048], index: 2, kind: output, shape index: {}]
  %s3 = sld [smem:[#allocation0]]
  $region41: #{tpu_custom_call.1} parent=0
    _
  %s5 = ssub.s32 1, %s3
  %s6 = scalar_select 0, %s5, %s3
  $region1: #{tpu_custom_call.1} parent=0
    #allocation2 [shape = 'u8[8192]{0}', space=vmem, size = 0x2000, scoped, tag = 'output window, operand 0']
    #allocation3 [shape = 's32[2]{0}', space=sflag, size = 0x8, scoped, tag = 'scoped memory for tpu_custom_call.1']
    %7 = vsyncpa [#allocation3], 0
    %s8 = scalar_lea.sflag [#allocation3], 1
    %9 = vsyncpa %s8, 0
    loop: start=0, step=1, limit=4
    $region2: #{tpu_custom_call.1} parent=1 // loop_pre_header
      _
    $region3: #{tpu_custom_call.1} parent=1 // loop_header
      %s11 = sphi 0, %s15
      %p12 = scmp.ge.s32.totalorder %s11, 4
      %s21 = sphi 0, %s23
      %s24 = sphi 0, %s21
      %s25 = sphi 0, %s24
      %s41 = sphi 0, %s25
      %s45 = sphi 0, %s45
      %s47 = sphi 0, %s45
      %s48 = sphi 0, %s47
      %s62 = sphi 0, %s48
      %s68 = sphi 0, %s70
      %s71 = sphi 0, %s68
      %s72 = sphi 0, %s71
      %s88 = sphi 0, %s72
    $region4: #{tpu_custom_call.1} parent=1 // loop_header_branch
      %14 = sbr.rel (%p12) target = $region8
    $region5: #{tpu_custom_call.1} parent=1 // loop_body
      %s16 = ssub.s32 %s11, 1
      %s17 = ssub.s32 %s11, 2
      %s18 = sadd.s32 %s11, 1
      %s19 = ssub.s32 %s11, %s18
      %p20 = scmp.eq.s32.totalorder %s19, 0
      %s22 = sadd.s32 %s21, 1
      %s23 = scalar_select %p20, %s21, %s22
      %p26 = pneg %p20
      %p27 = scmp.eq.s32.totalorder %s11, 1
      %p28 = por %p26, %p27
      %p29 = scmp.ne.s32.totalorder %s21, %s24
      %p30 = scmp.eq.s32.totalorder %s11, 0
      %p31 = por %p29, %p30
      %p32 = scmp.ne.s32.totalorder %s21, %s24
      %p33 = scmp.eq.s32.totalorder %s16, 1
      %p34 = por %p32, %p33
      %p35 = scmp.ne.s32.totalorder %s24, %s25
      %p36 = scmp.eq.s32.totalorder %s16, 0
      %p37 = por %p35, %p36
      %p38 = scmp.ne.s32.totalorder %s24, %s25
      %p39 = scmp.eq.s32.totalorder %s17, 1
      %p40 = por %p38, %p39
      %p42 = scmp.ne.s32.totalorder %s25, %s41
      %p43 = scmp.eq.s32.totalorder %s17, 0
      %p44 = por %p42, %p43
      %s46 = sadd.s32 %s45, 1
      %p49 = scmp.eq.s32.totalorder %s11, 1
      %p50 = scmp.ne.s32.totalorder %s45, %s47
      %p51 = scmp.eq.s32.totalorder %s11, 0
      %p52 = por %p50, %p51
      %p53 = scmp.ne.s32.totalorder %s45, %s47
      %p54 = scmp.eq.s32.totalorder %s16, 1
      %p55 = por %p53, %p54
      %p56 = scmp.ne.s32.totalorder %s47, %s48
      %p57 = scmp.eq.s32.totalorder %s16, 0
      %p58 = por %p56, %p57
      %p59 = scmp.ne.s32.totalorder %s47, %s48
      %p60 = scmp.eq.s32.totalorder %s17, 1
      %p61 = por %p59, %p60
      %p63 = scmp.ne.s32.totalorder %s48, %s62
      %p64 = scmp.eq.s32.totalorder %s17, 0
      %p65 = por %p63, %p64
      %s66 = ssub.s32 %s11, %s18
      %p67 = scmp.eq.s32.totalorder %s66, 0
      %s69 = sadd.s32 %s68, 1
      %s70 = scalar_select %p67, %s68, %s69
      %p73 = pneg %p67
      %p74 = scmp.eq.s32.totalorder %s11, 1
      %p75 = por %p73, %p74
      %p76 = scmp.ne.s32.totalorder %s68, %s71
      %p77 = scmp.eq.s32.totalorder %s11, 0
      %p78 = por %p76, %p77
      %p79 = scmp.ne.s32.totalorder %s68, %s71
      %p80 = scmp.eq.s32.totalorder %s16, 1
      %p81 = por %p79, %p80
      %p82 = scmp.ne.s32.totalorder %s71, %s72
      %p83 = scmp.eq.s32.totalorder %s16, 0
      %p84 = por %p82, %p83
      %p85 = scmp.ne.s32.totalorder %s71, %s72
      %p86 = scmp.eq.s32.totalorder %s17, 1
      %p87 = por %p85, %p86
      %p89 = scmp.ne.s32.totalorder %s72, %s88
      %p90 = scmp.eq.s32.totalorder %s17, 0
      %p91 = por %p89, %p90
      %p92 = scmp.le.s32.totalorder 1, %s11
      %p93 = scmp.lt.s32.totalorder %s11, 3
      %p94 = pnand %p92, %p93
      %p95 = pneg %p94
      // Predicated region
      $region9: #{tpu_custom_call.1} parent=5 // pred_check
        _
      $region10: #{tpu_custom_call.1} parent=5 // pred_check_branch
        %97 = sbr.rel (%p94) target = $region12
      $region11: #{tpu_custom_call.1} parent=5 // pred_region
        %s98 = ssub.s32 %s11, 1
        // Predicated region
        $region13: #{tpu_custom_call.1} parent=11 // pred_check
          %p99 = pneg %p58
        $region14: #{tpu_custom_call.1} parent=11 // pred_check_branch
          %101 = sbr.rel (%p99) target = $region16
        $region15: #{tpu_custom_call.1} parent=11 // pred_region
          _
        $region16: #{tpu_custom_call.1} parent=11 // pred_fallthru
          _
      $region12: #{tpu_custom_call.1} parent=5 // pred_fallthru
        _
      %p102 = scmp.lt.s32.totalorder %s11, 2
      // Predicated region
      $region17: #{tpu_custom_call.1} parent=5 // pred_check
        %p103 = pneg %p102
      $region18: #{tpu_custom_call.1} parent=5 // pred_check_branch
        %105 = sbr.rel (%p103) target = $region20
      $region19: #{tpu_custom_call.1} parent=5 // pred_region
        // Predicated region
        $region21: #{tpu_custom_call.1} parent=19 // pred_check
          %p106 = pneg %p31
        $region22: #{tpu_custom_call.1} parent=19 // pred_check_branch
          %108 = sbr.rel (%p106) target = $region24
        $region23: #{tpu_custom_call.1} parent=19 // pred_region
          %s109 = smul.u32 128, %s11
          %p110 = scmp.lt.s32.totalorder %s109, 255
          %s111 = scalar_select %p110, %s109, 255
          %s112 = smul.addr %s111, 8
          %s113 = scalar_lea.vmem %s0, %s112
          %s114 = smul.u32 128, %s11
        $region24: #{tpu_custom_call.1} parent=19 // pred_fallthru
          _
      $region20: #{tpu_custom_call.1} parent=5 // pred_fallthru
        _
      %p115 = scmp.le.s32.totalorder 1, %s11
      %p116 = scmp.lt.s32.totalorder %s11, 3
      %p117 = pnand %p115, %p116
      %p118 = pneg %p117
      // Predicated region
      $region25: #{tpu_custom_call.1} parent=5 // pred_check
        _
      $region26: #{tpu_custom_call.1} parent=5 // pred_check_branch
        %120 = sbr.rel (%p117) target = $region28
      $region27: #{tpu_custom_call.1} parent=5 // pred_region
        %s121 = ssub.s32 %s11, 1
        %s122 = smul.u32 128, %s16
        %p123 = scmp.lt.s32.totalorder %s122, 255
        %s124 = scalar_select %p123, %s122, 255
        %s125 = smul.addr %s124, 8
        %s126 = scalar_lea.vmem %s0, %s125
        %p127 = pneg %p37
        %p128 = pneg %p34
        %p129 = pneg %p58
        %p130 = pneg %p55
        %p131 = pneg %p84
        %p132 = pneg %p81
        %s133 = sand.u32 %s71, 1
        %s134 = scalar_lea.sflag [#allocation3], %s133
        %s135 = sand.u32 %s71, 1
        %s136 = smul.addr %s135, 8
        %s137 = scalar_lea.vmem [#allocation2], %s136
        %s138 = smul.u32 128, %s16
        %p139 = scmp.lt.s32.totalorder %s138, 255
        %s140 = scalar_select %p139, %s138, 255
        %s141 = smul.addr %s140, 8
        %s142 = scalar_lea.vmem %s0, %s141
        %s143 = smul.u32 128, %s16
        %s144 = smul.u32 8, %s16
        %v145 = vld [vmem:[%s142] sm:$0xff]
        %v146 = vld [vmem:[%s142 + $0x8] sm:$0xff]
        %v147 = vld [vmem:[%s142 + $0x10] sm:$0xff]
        %v148 = vld [vmem:[%s142 + $0x18] sm:$0xff]
        %v149 = vld [vmem:[%s142 + $0x20] sm:$0xff]
        %v150 = vld [vmem:[%s142 + $0x28] sm:$0xff]
        %v151 = vld [vmem:[%s142 + $0x30] sm:$0xff]
        %v152 = vld [vmem:[%s142 + $0x38] sm:$0xff]
        %v153 = vld [vmem:[%s142 + $0x40] sm:$0xff]
        %v154 = vld [vmem:[%s142 + $0x48] sm:$0xff]
        %v155 = vld [vmem:[%s142 + $0x50] sm:$0xff]
        %v156 = vld [vmem:[%s142 + $0x58] sm:$0xff]
        %v157 = vld [vmem:[%s142 + $0x60] sm:$0xff]
        %v158 = vld [vmem:[%s142 + $0x68] sm:$0xff]
        %v159 = vld [vmem:[%s142 + $0x70] sm:$0xff]
        %v160 = vld [vmem:[%s142 + $0x78] sm:$0xff]
        %v161 = vld [vmem:[%s142 + $0x80] sm:$0xff]
        %v162 = vld [vmem:[%s142 + $0x88] sm:$0xff]
        %v163 = vld [vmem:[%s142 + $0x90] sm:$0xff]
        %v164 = vld [vmem:[%s142 + $0x98] sm:$0xff]
        %v165 = vld [vmem:[%s142 + $0xa0] sm:$0xff]
        %v166 = vld [vmem:[%s142 + $0xa8] sm:$0xff]
        %v167 = vld [vmem:[%s142 + $0xb0] sm:$0xff]
        %v168 = vld [vmem:[%s142 + $0xb8] sm:$0xff]
        %v169 = vld [vmem:[%s142 + $0xc0] sm:$0xff]
        %v170 = vld [vmem:[%s142 + $0xc8] sm:$0xff]
        %v171 = vld [vmem:[%s142 + $0xd0] sm:$0xff]
        %v172 = vld [vmem:[%s142 + $0xd8] sm:$0xff]
        %v173 = vld [vmem:[%s142 + $0xe0] sm:$0xff]
        %v174 = vld [vmem:[%s142 + $0xe8] sm:$0xff]
        %v175 = vld [vmem:[%s142 + $0xf0] sm:$0xff]
        %v176 = vld [vmem:[%s142 + $0xf8] sm:$0xff]
        %v177 = vld [vmem:[%s142 + $0x100] sm:$0xff]
        %v178 = vld [vmem:[%s142 + $0x108] sm:$0xff]
        %v179 = vld [vmem:[%s142 + $0x110] sm:$0xff]
        %v180 = vld [vmem:[%s142 + $0x118] sm:$0xff]
        %v181 = vld [vmem:[%s142 + $0x120] sm:$0xff]
        %v182 = vld [vmem:[%s142 + $0x128] sm:$0xff]
        %v183 = vld [vmem:[%s142 + $0x130] sm:$0xff]
        %v184 = vld [vmem:[%s142 + $0x138] sm:$0xff]
        %v185 = vld [vmem:[%s142 + $0x140] sm:$0xff]
        %v186 = vld [vmem:[%s142 + $0x148] sm:$0xff]
        %v187 = vld [vmem:[%s142 + $0x150] sm:$0xff]
        %v188 = vld [vmem:[%s142 + $0x158] sm:$0xff]
        %v189 = vld [vmem:[%s142 + $0x160] sm:$0xff]
        %v190 = vld [vmem:[%s142 + $0x168] sm:$0xff]
        %v191 = vld [vmem:[%s142 + $0x170] sm:$0xff]
        %v192 = vld [vmem:[%s142 + $0x178] sm:$0xff]
        %v193 = vld [vmem:[%s142 + $0x180] sm:$0xff]
        %v194 = vld [vmem:[%s142 + $0x188] sm:$0xff]
        %v195 = vld [vmem:[%s142 + $0x190] sm:$0xff]
        %v196 = vld [vmem:[%s142 + $0x198] sm:$0xff]
        %v197 = vld [vmem:[%s142 + $0x1a0] sm:$0xff]
        %v198 = vld [vmem:[%s142 + $0x1a8] sm:$0xff]
        %v199 = vld [vmem:[%s142 + $0x1b0] sm:$0xff]
        %v200 = vld [vmem:[%s142 + $0x1b8] sm:$0xff]
        %v201 = vld [vmem:[%s142 + $0x1c0] sm:$0xff]
        %v202 = vld [vmem:[%s142 + $0x1c8] sm:$0xff]
        %v203 = vld [vmem:[%s142 + $0x1d0] sm:$0xff]
        %v204 = vld [vmem:[%s142 + $0x1d8] sm:$0xff]
        %v205 = vld [vmem:[%s142 + $0x1e0] sm:$0xff]
        %v206 = vld [vmem:[%s142 + $0x1e8] sm:$0xff]
        %v207 = vld [vmem:[%s142 + $0x1f0] sm:$0xff]
        %v208 = vld [vmem:[%s142 + $0x1f8] sm:$0xff]
        %v209 = vld [vmem:[%s142 + $0x200] sm:$0xff]
        %v210 = vld [vmem:[%s142 + $0x208] sm:$0xff]
        %v211 = vld [vmem:[%s142 + $0x210] sm:$0xff]
        %v212 = vld [vmem:[%s142 + $0x218] sm:$0xff]
        %v213 = vld [vmem:[%s142 + $0x220] sm:$0xff]
        %v214 = vld [vmem:[%s142 + $0x228] sm:$0xff]
        %v215 = vld [vmem:[%s142 + $0x230] sm:$0xff]
        %v216 = vld [vmem:[%s142 + $0x238] sm:$0xff]
        %v217 = vld [vmem:[%s142 + $0x240] sm:$0xff]
        %v218 = vld [vmem:[%s142 + $0x248] sm:$0xff]
        %v219 = vld [vmem:[%s142 + $0x250] sm:$0xff]
        %v220 = vld [vmem:[%s142 + $0x258] sm:$0xff]
        %v221 = vld [vmem:[%s142 + $0x260] sm:$0xff]
        %v222 = vld [vmem:[%s142 + $0x268] sm:$0xff]
        %v223 = vld [vmem:[%s142 + $0x270] sm:$0xff]
        %v224 = vld [vmem:[%s142 + $0x278] sm:$0xff]
        %v225 = vld [vmem:[%s142 + $0x280] sm:$0xff]
        %v226 = vld [vmem:[%s142 + $0x288] sm:$0xff]
        %v227 = vld [vmem:[%s142 + $0x290] sm:$0xff]
        %v228 = vld [vmem:[%s142 + $0x298] sm:$0xff]
        %v229 = vld [vmem:[%s142 + $0x2a0] sm:$0xff]
        %v230 = vld [vmem:[%s142 + $0x2a8] sm:$0xff]
        %v231 = vld [vmem:[%s142 + $0x2b0] sm:$0xff]
        %v232 = vld [vmem:[%s142 + $0x2b8] sm:$0xff]
        %v233 = vld [vmem:[%s142 + $0x2c0] sm:$0xff]
        %v234 = vld [vmem:[%s142 + $0x2c8] sm:$0xff]
        %v235 = vld [vmem:[%s142 + $0x2d0] sm:$0xff]
        %v236 = vld [vmem:[%s142 + $0x2d8] sm:$0xff]
        %v237 = vld [vmem:[%s142 + $0x2e0] sm:$0xff]
        %v238 = vld [vmem:[%s142 + $0x2e8] sm:$0xff]
        %v239 = vld [vmem:[%s142 + $0x2f0] sm:$0xff]
        %v240 = vld [vmem:[%s142 + $0x2f8] sm:$0xff]
        %v241 = vld [vmem:[%s142 + $0x300] sm:$0xff]
        %v242 = vld [vmem:[%s142 + $0x308] sm:$0xff]
        %v243 = vld [vmem:[%s142 + $0x310] sm:$0xff]
        %v244 = vld [vmem:[%s142 + $0x318] sm:$0xff]
        %v245 = vld [vmem:[%s142 + $0x320] sm:$0xff]
        %v246 = vld [vmem:[%s142 + $0x328] sm:$0xff]
        %v247 = vld [vmem:[%s142 + $0x330] sm:$0xff]
        %v248 = vld [vmem:[%s142 + $0x338] sm:$0xff]
        %v249 = vld [vmem:[%s142 + $0x340] sm:$0xff]
        %v250 = vld [vmem:[%s142 + $0x348] sm:$0xff]
        %v251 = vld [vmem:[%s142 + $0x350] sm:$0xff]
        %v252 = vld [vmem:[%s142 + $0x358] sm:$0xff]
        %v253 = vld [vmem:[%s142 + $0x360] sm:$0xff]
        %v254 = vld [vmem:[%s142 + $0x368] sm:$0xff]
        %v255 = vld [vmem:[%s142 + $0x370] sm:$0xff]
        %v256 = vld [vmem:[%s142 + $0x378] sm:$0xff]
        %v257 = vld [vmem:[%s142 + $0x380] sm:$0xff]
        %v258 = vld [vmem:[%s142 + $0x388] sm:$0xff]
        %v259 = vld [vmem:[%s142 + $0x390] sm:$0xff]
        %v260 = vld [vmem:[%s142 + $0x398] sm:$0xff]
        %v261 = vld [vmem:[%s142 + $0x3a0] sm:$0xff]
        %v262 = vld [vmem:[%s142 + $0x3a8] sm:$0xff]
        %v263 = vld [vmem:[%s142 + $0x3b0] sm:$0xff]
        %v264 = vld [vmem:[%s142 + $0x3b8] sm:$0xff]
        %v265 = vld [vmem:[%s142 + $0x3c0] sm:$0xff]
        %v266 = vld [vmem:[%s142 + $0x3c8] sm:$0xff]
        %v267 = vld [vmem:[%s142 + $0x3d0] sm:$0xff]
        %v268 = vld [vmem:[%s142 + $0x3d8] sm:$0xff]
        %v269 = vld [vmem:[%s142 + $0x3e0] sm:$0xff]
        %v270 = vld [vmem:[%s142 + $0x3e8] sm:$0xff]
        %v271 = vld [vmem:[%s142 + $0x3f0] sm:$0xff]
        %v272 = vld [vmem:[%s142 + $0x3f8] sm:$0xff]
        %v273 = vld [vmem:[%s1] sm:$0xff]
        %v274 = vld [vmem:[%s1 + $0x8] sm:$0xff]
        %v275 = vld [vmem:[%s1 + $0x10] sm:$0xff]
        %v276 = vld [vmem:[%s1 + $0x18] sm:$0xff]
        %v277 = vld [vmem:[%s1 + $0x20] sm:$0xff]
        %v278 = vld [vmem:[%s1 + $0x28] sm:$0xff]
        %v279 = vld [vmem:[%s1 + $0x30] sm:$0xff]
        %v280 = vld [vmem:[%s1 + $0x38] sm:$0xff]
        %282 = vset.pattern.permute.xlu0 127
        %283 = vperm.xlu0 %282, %v273
        %v284 = vpop.permute.xlu0 %283
        %287 = vset.pattern.permute.xlu0 127
        %288 = vperm.xlu0 %287, %v274
        %v289 = vpop.permute.xlu0 %288
        %292 = vset.pattern.permute.xlu0 127
        %293 = vperm.xlu0 %292, %v275
        %v294 = vpop.permute.xlu0 %293
        %297 = vset.pattern.permute.xlu0 127
        %298 = vperm.xlu0 %297, %v276
        %v299 = vpop.permute.xlu0 %298
        %302 = vset.pattern.permute.xlu0 127
        %303 = vperm.xlu0 %302, %v277
        %v304 = vpop.permute.xlu0 %303
        %307 = vset.pattern.permute.xlu0 127
        %308 = vperm.xlu0 %307, %v278
        %v309 = vpop.permute.xlu0 %308
        %312 = vset.pattern.permute.xlu0 127
        %313 = vperm.xlu0 %312, %v279
        %v314 = vpop.permute.xlu0 %313
        %317 = vset.pattern.permute.xlu0 127
        %318 = vperm.xlu0 %317, %v280
        %v319 = vpop.permute.xlu0 %318
        %vm321 = vcmask 64512
        %v322 = vsel %vm321, %v273, 0
        %v324 = vsel %vm321, %v274, 0
        %v326 = vsel %vm321, %v275, 0
        %v328 = vsel %vm321, %v276, 0
        %v330 = vsel %vm321, %v277, 0
        %v332 = vsel %vm321, %v278, 0
        %v334 = vsel %vm321, %v279, 0
        %v336 = vsel %vm321, %v280, 0
        %v339 = vsel %vm321, %v145, 0
        %v342 = vsel %vm321, %v146, 0
        %v345 = vsel %vm321, %v147, 0
        %v348 = vsel %vm321, %v148, 0
        %v351 = vsel %vm321, %v149, 0
        %v354 = vsel %vm321, %v150, 0
        %v357 = vsel %vm321, %v151, 0
        %v360 = vsel %vm321, %v152, 0
        %v363 = vsel %vm321, %v153, 0
        %v366 = vsel %vm321, %v154, 0
        %v369 = vsel %vm321, %v155, 0
        %v372 = vsel %vm321, %v156, 0
        %v375 = vsel %vm321, %v157, 0
        %v378 = vsel %vm321, %v158, 0
        %v381 = vsel %vm321, %v159, 0
        %v384 = vsel %vm321, %v160, 0
        %v387 = vsel %vm321, %v161, 0
        %v390 = vsel %vm321, %v162, 0
        %v393 = vsel %vm321, %v163, 0
        %v396 = vsel %vm321, %v164, 0
        %v399 = vsel %vm321, %v165, 0
        %v402 = vsel %vm321, %v166, 0
        %v405 = vsel %vm321, %v167, 0
        %v408 = vsel %vm321, %v168, 0
        %v411 = vsel %vm321, %v169, 0
        %v414 = vsel %vm321, %v170, 0
        %v417 = vsel %vm321, %v171, 0
        %v420 = vsel %vm321, %v172, 0
        %v423 = vsel %vm321, %v173, 0
        %v426 = vsel %vm321, %v174, 0
        %v429 = vsel %vm321, %v175, 0
        %v432 = vsel %vm321, %v176, 0
        %v435 = vsel %vm321, %v177, 0
        %v438 = vsel %vm321, %v178, 0
        %v441 = vsel %vm321, %v179, 0
        %v444 = vsel %vm321, %v180, 0
        %v447 = vsel %vm321, %v181, 0
        %v450 = vsel %vm321, %v182, 0
        %v453 = vsel %vm321, %v183, 0
        %v456 = vsel %vm321, %v184, 0
        %v459 = vsel %vm321, %v185, 0
        %v462 = vsel %vm321, %v186, 0
        %v465 = vsel %vm321, %v187, 0
        %v468 = vsel %vm321, %v188, 0
        %v471 = vsel %vm321, %v189, 0
        %v474 = vsel %vm321, %v190, 0
        %v477 = vsel %vm321, %v191, 0
        %v480 = vsel %vm321, %v192, 0
        %v483 = vsel %vm321, %v193, 0
        %v486 = vsel %vm321, %v194, 0
        %v489 = vsel %vm321, %v195, 0
        %v492 = vsel %vm321, %v196, 0
        %v495 = vsel %vm321, %v197, 0
        %v498 = vsel %vm321, %v198, 0
        %v501 = vsel %vm321, %v199, 0
        %v504 = vsel %vm321, %v200, 0
        %v507 = vsel %vm321, %v201, 0
        %v510 = vsel %vm321, %v202, 0
        %v513 = vsel %vm321, %v203, 0
        %v516 = vsel %vm321, %v204, 0
        %v519 = vsel %vm321, %v205, 0
        %v522 = vsel %vm321, %v206, 0
        %v525 = vsel %vm321, %v207, 0
        %v528 = vsel %vm321, %v208, 0
        %v531 = vsel %vm321, %v209, 0
        %v534 = vsel %vm321, %v210, 0
        %v537 = vsel %vm321, %v211, 0
        %v540 = vsel %vm321, %v212, 0
        %v543 = vsel %vm321, %v213, 0
        %v546 = vsel %vm321, %v214, 0
        %v549 = vsel %vm321, %v215, 0
        %v552 = vsel %vm321, %v216, 0
        %v555 = vsel %vm321, %v217, 0
        %v558 = vsel %vm321, %v218, 0
        %v561 = vsel %vm321, %v219, 0
        %v564 = vsel %vm321, %v220, 0
        %v567 = vsel %vm321, %v221, 0
        %v570 = vsel %vm321, %v222, 0
        %v573 = vsel %vm321, %v223, 0
        %v576 = vsel %vm321, %v224, 0
        %v579 = vsel %vm321, %v225, 0
        %v582 = vsel %vm321, %v226, 0
        %v585 = vsel %vm321, %v227, 0
        %v588 = vsel %vm321, %v228, 0
        %v591 = vsel %vm321, %v229, 0
        %v594 = vsel %vm321, %v230, 0
        %v597 = vsel %vm321, %v231, 0
        %v600 = vsel %vm321, %v232, 0
        %v603 = vsel %vm321, %v233, 0
        %v606 = vsel %vm321, %v234, 0
        %v609 = vsel %vm321, %v235, 0
        %v612 = vsel %vm321, %v236, 0
        %v615 = vsel %vm321, %v237, 0
        %v618 = vsel %vm321, %v238, 0
        %v621 = vsel %vm321, %v239, 0
        %v624 = vsel %vm321, %v240, 0
        %v627 = vsel %vm321, %v241, 0
        %v630 = vsel %vm321, %v242, 0
        %v633 = vsel %vm321, %v243, 0
        %v636 = vsel %vm321, %v244, 0
        %v639 = vsel %vm321, %v245, 0
        %v642 = vsel %vm321, %v246, 0
        %v645 = vsel %vm321, %v247, 0
        %v648 = vsel %vm321, %v248, 0
        %v651 = vsel %vm321, %v249, 0
        %v654 = vsel %vm321, %v250, 0
        %v657 = vsel %vm321, %v251, 0
        %v660 = vsel %vm321, %v252, 0
        %v663 = vsel %vm321, %v253, 0
        %v666 = vsel %vm321, %v254, 0
        %v669 = vsel %vm321, %v255, 0
        %v672 = vsel %vm321, %v256, 0
        %v675 = vsel %vm321, %v257, 0
        %v678 = vsel %vm321, %v258, 0
        %v681 = vsel %vm321, %v259, 0
        %v684 = vsel %vm321, %v260, 0
        %v687 = vsel %vm321, %v261, 0
        %v690 = vsel %vm321, %v262, 0
        %v693 = vsel %vm321, %v263, 0
        %v696 = vsel %vm321, %v264, 0
        %v699 = vsel %vm321, %v265, 0
        %v702 = vsel %vm321, %v266, 0
        %v705 = vsel %vm321, %v267, 0
        %v708 = vsel %vm321, %v268, 0
        %v711 = vsel %vm321, %v269, 0
        %v714 = vsel %vm321, %v270, 0
        %v717 = vsel %vm321, %v271, 0
        %v720 = vsel %vm321, %v272, 0
        %722 = vmatprep.subr.mxu0 0.0
        %723 = vmatpush1.xpose.msra.mxu0 %v339
        %724 = vmatprep.subr.mxu0 0.0
        %725 = vmatpush1.xpose.msra.mxu0 %v342
        %726 = vmatprep.subr.mxu0 0.0
        %727 = vmatpush1.xpose.msra.mxu0 %v345
        %728 = vmatprep.subr.mxu0 0.0
        %729 = vmatpush1.xpose.msra.mxu0 %v348
        %730 = vmatprep.subr.mxu0 0.0
        %731 = vmatpush1.xpose.msra.mxu0 %v351
        %732 = vmatprep.subr.mxu0 0.0
        %733 = vmatpush1.xpose.msra.mxu0 %v354
        %734 = vmatprep.subr.mxu0 0.0
        %735 = vmatpush1.xpose.msra.mxu0 %v357
        %736 = vmatprep.subr.mxu0 0.0
        %737 = vmatpush1.xpose.msra.mxu0 %v360
        %738 = vmatprep.subr.mxu0 0.0
        %739 = vmatpush1.xpose.msra.mxu0 %v363
        %740 = vmatprep.subr.mxu0 0.0
        %741 = vmatpush1.xpose.msra.mxu0 %v366
        %742 = vmatprep.subr.mxu0 0.0
        %743 = vmatpush1.xpose.msra.mxu0 %v369
        %744 = vmatprep.subr.mxu0 0.0
        %745 = vmatpush1.xpose.msra.mxu0 %v372
        %746 = vmatprep.subr.mxu0 0.0
        %747 = vmatpush1.xpose.msra.mxu0 %v375
        %748 = vmatprep.subr.mxu0 0.0
        %749 = vmatpush1.xpose.msra.mxu0 %v378
        %750 = vmatprep.subr.mxu0 0.0
        %751 = vmatpush1.xpose.msra.mxu0 %v381
        %752 = vmatprep.subr.mxu0 0.0
        %753 = vmatpush1.xpose.msra.mxu0 %v384
        %754 = vmatprep.subr.mxu0 0.0
        %755 = vmatpush1.xpose.msra.mxu0 %v387
        %756 = vmatprep.subr.mxu0 0.0
        %757 = vmatpush1.xpose.msra.mxu0 %v390
        %758 = vmatprep.subr.mxu0 0.0
        %759 = vmatpush1.xpose.msra.mxu0 %v393
        %760 = vmatprep.subr.mxu0 0.0
        %761 = vmatpush1.xpose.msra.mxu0 %v396
        %762 = vmatprep.subr.mxu0 0.0
        %763 = vmatpush1.xpose.msra.mxu0 %v399
        %764 = vmatprep.subr.mxu0 0.0
        %765 = vmatpush1.xpose.msra.mxu0 %v402
        %766 = vmatprep.subr.mxu0 0.0
        %767 = vmatpush1.xpose.msra.mxu0 %v405
        %768 = vmatprep.subr.mxu0 0.0
        %769 = vmatpush1.xpose.msra.mxu0 %v408
        %770 = vmatprep.subr.mxu0 0.0
        %771 = vmatpush1.xpose.msra.mxu0 %v411
        %772 = vmatprep.subr.mxu0 0.0
        %773 = vmatpush1.xpose.msra.mxu0 %v414
        %774 = vmatprep.subr.mxu0 0.0
        %775 = vmatpush1.xpose.msra.mxu0 %v417
        %776 = vmatprep.subr.mxu0 0.0
        %777 = vmatpush1.xpose.msra.mxu0 %v420
        %778 = vmatprep.subr.mxu0 0.0
        %779 = vmatpush1.xpose.msra.mxu0 %v423
        %780 = vmatprep.subr.mxu0 0.0
        %781 = vmatpush1.xpose.msra.mxu0 %v426
        %782 = vmatprep.subr.mxu0 0.0
        %783 = vmatpush1.xpose.msra.mxu0 %v429
        %784 = vmatprep.subr.mxu0 0.0
        %785 = vmatpush1.xpose.msra.mxu0 %v432
        %786 = vmatprep.mubr.f32.mxu0 0.0
        %787 = vmatmul.mubr.f32.gmra.mrb[0].mxu0 %v322
        %v788 = vpop.f32.mrb[0].mxu0
        %v789 = vadd.f32 %v284, %v788
        %v790 = vpop.f32.mrb[0].mxu0
        %v791 = vadd.f32 %v284, %v790
        %792 = vmatprep.mubr.f32.mxu0 0.0
        %793 = vmatmul.mubr.f32.gmra.mrb[0].mxu0 %v324
        %v794 = vpop.f32.mrb[0].mxu0
        %v795 = vadd.f32 %v289, %v794
        %v796 = vpop.f32.mrb[0].mxu0
        %v797 = vadd.f32 %v289, %v796
        %798 = vmatprep.mubr.f32.mxu0 0.0
        %799 = vmatmul.mubr.f32.gmra.mrb[0].mxu0 %v326
        %v800 = vpop.f32.mrb[0].mxu0
        %v801 = vadd.f32 %v294, %v800
        %v802 = vpop.f32.mrb[0].mxu0
        %v803 = vadd.f32 %v294, %v802
        %804 = vmatprep.mubr.f32.mxu0 0.0
        %805 = vmatmul.mubr.f32.gmra.mrb[0].mxu0 %v328
        %v806 = vpop.f32.mrb[0].mxu0
        %v807 = vadd.f32 %v299, %v806
        %v808 = vpop.f32.mrb[0].mxu0
        %v809 = vadd.f32 %v299, %v808
        %810 = vmatprep.mubr.f32.mxu0 0.0
        %811 = vmatmul.mubr.f32.gmra.mrb[0].mxu0 %v330
        %v812 = vpop.f32.mrb[0].mxu0
        %v813 = vadd.f32 %v304, %v812
        %v814 = vpop.f32.mrb[0].mxu0
        %v815 = vadd.f32 %v304, %v814
        %816 = vmatprep.mubr.f32.mxu0 0.0
        %817 = vmatmul.mubr.f32.gmra.mrb[0].mxu0 %v332
        %v818 = vpop.f32.mrb[0].mxu0
        %v819 = vadd.f32 %v309, %v818
        %v820 = vpop.f32.mrb[0].mxu0
        %v821 = vadd.f32 %v309, %v820
        %822 = vmatprep.mubr.f32.mxu0 0.0
        %823 = vmatmul.mubr.f32.gmra.mrb[0].mxu0 %v334
        %v824 = vpop.f32.mrb[0].mxu0
        %v825 = vadd.f32 %v314, %v824
        %v826 = vpop.f32.mrb[0].mxu0
        %v827 = vadd.f32 %v314, %v826
        %828 = vmatprep.mubr.f32.mxu0 0.0
        %829 = vmatmul.mubr.f32.gmra.mrb[0].mxu0 %v336
        %v830 = vpop.f32.mrb[0].mxu0
        %v831 = vadd.f32 %v319, %v830
        %v832 = vpop.f32.mrb[0].mxu0
        %v833 = vadd.f32 %v319, %v832
        %834 = vdwg.mxu0
        %835 = vmatprep.subr.mxu0 0.0
        %836 = vmatpush1.xpose.msra.mxu0 %v435
        %837 = vmatprep.subr.mxu0 0.0
        %838 = vmatpush1.xpose.msra.mxu0 %v438
        %839 = vmatprep.subr.mxu0 0.0
        %840 = vmatpush1.xpose.msra.mxu0 %v441
        %841 = vmatprep.subr.mxu0 0.0
        %842 = vmatpush1.xpose.msra.mxu0 %v444
        %843 = vmatprep.subr.mxu0 0.0
        %844 = vmatpush1.xpose.msra.mxu0 %v447
        %845 = vmatprep.subr.mxu0 0.0
        %846 = vmatpush1.xpose.msra.mxu0 %v450
        %847 = vmatprep.subr.mxu0 0.0
        %848 = vmatpush1.xpose.msra.mxu0 %v453
        %849 = vmatprep.subr.mxu0 0.0
        %850 = vmatpush1.xpose.msra.mxu0 %v456
        %851 = vmatprep.subr.mxu0 0.0
        %852 = vmatpush1.xpose.msra.mxu0 %v459
        %853 = vmatprep.subr.mxu0 0.0
        %854 = vmatpush1.xpose.msra.mxu0 %v462
        %855 = vmatprep.subr.mxu0 0.0
        %856 = vmatpush1.xpose.msra.mxu0 %v465
        %857 = vmatprep.subr.mxu0 0.0
        %858 = vmatpush1.xpose.msra.mxu0 %v468
        %859 = vmatprep.subr.mxu0 0.0
        %860 = vmatpush1.xpose.msra.mxu0 %v471
        %861 = vmatprep.subr.mxu0 0.0
        %862 = vmatpush1.xpose.msra.mxu0 %v474
        %863 = vmatprep.subr.mxu0 0.0
        %864 = vmatpush1.xpose.msra.mxu0 %v477
        %865 = vmatprep.subr.mxu0 0.0
        %866 = vmatpush1.xpose.msra.mxu0 %v480
        %867 = vmatprep.subr.mxu0 0.0
        %868 = vmatpush1.xpose.msra.mxu0 %v483
        %869 = vmatprep.subr.mxu0 0.0
        %870 = vmatpush1.xpose.msra.mxu0 %v486
        %871 = vmatprep.subr.mxu0 0.0
        %872 = vmatpush1.xpose.msra.mxu0 %v489
        %873 = vmatprep.subr.mxu0 0.0
        %874 = vmatpush1.xpose.msra.mxu0 %v492
        %875 = vmatprep.subr.mxu0 0.0
        %876 = vmatpush1.xpose.msra.mxu0 %v495
        %877 = vmatprep.subr.mxu0 0.0
        %878 = vmatpush1.xpose.msra.mxu0 %v498
        %879 = vmatprep.subr.mxu0 0.0
        %880 = vmatpush1.xpose.msra.mxu0 %v501
        %881 = vmatprep.subr.mxu0 0.0
        %882 = vmatpush1.xpose.msra.mxu0 %v504
        %883 = vmatprep.subr.mxu0 0.0
        %884 = vmatpush1.xpose.msra.mxu0 %v507
        %885 = vmatprep.subr.mxu0 0.0
        %886 = vmatpush1.xpose.msra.mxu0 %v510
        %887 = vmatprep.subr.mxu0 0.0
        %888 = vmatpush1.xpose.msra.mxu0 %v513
        %889 = vmatprep.subr.mxu0 0.0
        %890 = vmatpush1.xpose.msra.mxu0 %v516
        %891 = vmatprep.subr.mxu0 0.0
        %892 = vmatpush1.xpose.msra.mxu0 %v519
        %893 = vmatprep.subr.mxu0 0.0
        %894 = vmatpush1.xpose.msra.mxu0 %v522
        %895 = vmatprep.subr.mxu0 0.0
        %896 = vmatpush1.xpose.msra.mxu0 %v525
        %897 = vmatprep.subr.mxu0 0.0
        %898 = vmatpush1.xpose.msra.mxu0 %v528
        %899 = vmatprep.mubr.f32.mxu0 0.0
        %900 = vmatmul.mubr.f32.gmra.mrb[0].mxu0 %v322
        %v901 = vpop.f32.mrb[0].mxu0
        %v902 = vadd.f32 %v284, %v901
        %v903 = vpop.f32.mrb[0].mxu0
        %v904 = vadd.f32 %v284, %v903
        %905 = vmatprep.mubr.f32.mxu0 0.0
        %906 = vmatmul.mubr.f32.gmra.mrb[0].mxu0 %v324
        %v907 = vpop.f32.mrb[0].mxu0
        %v908 = vadd.f32 %v289, %v907
        %v909 = vpop.f32.mrb[0].mxu0
        %v910 = vadd.f32 %v289, %v909
        %911 = vmatprep.mubr.f32.mxu0 0.0
        %912 = vmatmul.mubr.f32.gmra.mrb[0].mxu0 %v326
        %v913 = vpop.f32.mrb[0].mxu0
        %v914 = vadd.f32 %v294, %v913
        %v915 = vpop.f32.mrb[0].mxu0
        %v916 = vadd.f32 %v294, %v915
        %917 = vmatprep.mubr.f32.mxu0 0.0
        %918 = vmatmul.mubr.f32.gmra.mrb[0].mxu0 %v328
        %v919 = vpop.f32.mrb[0].mxu0
        %v920 = vadd.f32 %v299, %v919
        %v921 = vpop.f32.mrb[0].mxu0
        %v922 = vadd.f32 %v299, %v921
        %923 = vmatprep.mubr.f32.mxu0 0.0
        %924 = vmatmul.mubr.f32.gmra.mrb[0].mxu0 %v330
        %v925 = vpop.f32.mrb[0].mxu0
        %v926 = vadd.f32 %v304, %v925
        %v927 = vpop.f32.mrb[0].mxu0
        %v928 = vadd.f32 %v304, %v927
        %929 = vmatprep.mubr.f32.mxu0 0.0
        %930 = vmatmul.mubr.f32.gmra.mrb[0].mxu0 %v332
        %v931 = vpop.f32.mrb[0].mxu0
        %v932 = vadd.f32 %v309, %v931
        %v933 = vpop.f32.mrb[0].mxu0
        %v934 = vadd.f32 %v309, %v933
        %935 = vmatprep.mubr.f32.mxu0 0.0
        %936 = vmatmul.mubr.f32.gmra.mrb[0].mxu0 %v334
        %v937 = vpop.f32.mrb[0].mxu0
        %v938 = vadd.f32 %v314, %v937
        %v939 = vpop.f32.mrb[0].mxu0
        %v940 = vadd.f32 %v314, %v939
        %941 = vmatprep.mubr.f32.mxu0 0.0
        %942 = vmatmul.mubr.f32.gmra.mrb[0].mxu0 %v336
        %v943 = vpop.f32.mrb[0].mxu0
        %v944 = vadd.f32 %v319, %v943
        %v945 = vpop.f32.mrb[0].mxu0
        %v946 = vadd.f32 %v319, %v945
        %947 = vdwg.mxu0
        %948 = vmatprep.subr.mxu0 0.0
        %949 = vmatpush1.xpose.msra.mxu0 %v531
        %950 = vmatprep.subr.mxu0 0.0
        %951 = vmatpush1.xpose.msra.mxu0 %v534
        %952 = vmatprep.subr.mxu0 0.0
        %953 = vmatpush1.xpose.msra.mxu0 %v537
        %954 = vmatprep.subr.mxu0 0.0
        %955 = vmatpush1.xpose.msra.mxu0 %v540
        %956 = vmatprep.subr.mxu0 0.0
        %957 = vmatpush1.xpose.msra.mxu0 %v543
        %958 = vmatprep.subr.mxu0 0.0
        %959 = vmatpush1.xpose.msra.mxu0 %v546
        %960 = vmatprep.subr.mxu0 0.0
        %961 = vmatpush1.xpose.msra.mxu0 %v549
        %962 = vmatprep.subr.mxu0 0.0
        %963 = vmatpush1.xpose.msra.mxu0 %v552
        %964 = vmatprep.subr.mxu0 0.0
        %965 = vmatpush1.xpose.msra.mxu0 %v555
        %966 = vmatprep.subr.mxu0 0.0
        %967 = vmatpush1.xpose.msra.mxu0 %v558
        %968 = vmatprep.subr.mxu0 0.0
        %969 = vmatpush1.xpose.msra.mxu0 %v561
        %970 = vmatprep.subr.mxu0 0.0
        %971 = vmatpush1.xpose.msra.mxu0 %v564
        %972 = vmatprep.subr.mxu0 0.0
        %973 = vmatpush1.xpose.msra.mxu0 %v567
        %974 = vmatprep.subr.mxu0 0.0
        %975 = vmatpush1.xpose.msra.mxu0 %v570
        %976 = vmatprep.subr.mxu0 0.0
        %977 = vmatpush1.xpose.msra.mxu0 %v573
        %978 = vmatprep.subr.mxu0 0.0
        %979 = vmatpush1.xpose.msra.mxu0 %v576
        %980 = vmatprep.subr.mxu0 0.0
        %981 = vmatpush1.xpose.msra.mxu0 %v579
        %982 = vmatprep.subr.mxu0 0.0
        %983 = vmatpush1.xpose.msra.mxu0 %v582
        %984 = vmatprep.subr.mxu0 0.0
        %985 = vmatpush1.xpose.msra.mxu0 %v585
        %986 = vmatprep.subr.mxu0 0.0
        %987 = vmatpush1.xpose.msra.mxu0 %v588
        %988 = vmatprep.subr.mxu0 0.0
        %989 = vmatpush1.xpose.msra.mxu0 %v591
        %990 = vmatprep.subr.mxu0 0.0
        %991 = vmatpush1.xpose.msra.mxu0 %v594
        %992 = vmatprep.subr.mxu0 0.0
        %993 = vmatpush1.xpose.msra.mxu0 %v597
        %994 = vmatprep.subr.mxu0 0.0
        %995 = vmatpush1.xpose.msra.mxu0 %v600
        %996 = vmatprep.subr.mxu0 0.0
        %997 = vmatpush1.xpose.msra.mxu0 %v603
        %998 = vmatprep.subr.mxu0 0.0
        %999 = vmatpush1.xpose.msra.mxu0 %v606
        %1000 = vmatprep.subr.mxu0 0.0
        %1001 = vmatpush1.xpose.msra.mxu0 %v609
        %1002 = vmatprep.subr.mxu0 0.0
        %1003 = vmatpush1.xpose.msra.mxu0 %v612
        %1004 = vmatprep.subr.mxu0 0.0
        %1005 = vmatpush1.xpose.msra.mxu0 %v615
        %1006 = vmatprep.subr.mxu0 0.0
        %1007 = vmatpush1.xpose.msra.mxu0 %v618
        %1008 = vmatprep.subr.mxu0 0.0
        %1009 = vmatpush1.xpose.msra.mxu0 %v621
        %1010 = vmatprep.subr.mxu0 0.0
        %1011 = vmatpush1.xpose.msra.mxu0 %v624
        %1012 = vmatprep.mubr.f32.mxu0 0.0
        %1013 = vmatmul.mubr.f32.gmra.mrb[0].mxu0 %v322
        %v1014 = vpop.f32.mrb[0].mxu0
        %v1015 = vadd.f32 %v284, %v1014
        %v1016 = vpop.f32.mrb[0].mxu0
        %v1017 = vadd.f32 %v284, %v1016
        %1018 = vmatprep.mubr.f32.mxu0 0.0
        %1019 = vmatmul.mubr.f32.gmra.mrb[0].mxu0 %v324
        %v1020 = vpop.f32.mrb[0].mxu0
        %v1021 = vadd.f32 %v289, %v1020
        %v1022 = vpop.f32.mrb[0].mxu0
        %v1023 = vadd.f32 %v289, %v1022
        %1024 = vmatprep.mubr.f32.mxu0 0.0
        %1025 = vmatmul.mubr.f32.gmra.mrb[0].mxu0 %v326
        %v1026 = vpop.f32.mrb[0].mxu0
        %v1027 = vadd.f32 %v294, %v1026
        %v1028 = vpop.f32.mrb[0].mxu0
        %v1029 = vadd.f32 %v294, %v1028
        %1030 = vmatprep.mubr.f32.mxu0 0.0
        %1031 = vmatmul.mubr.f32.gmra.mrb[0].mxu0 %v328
        %v1032 = vpop.f32.mrb[0].mxu0
        %v1033 = vadd.f32 %v299, %v1032
        %v1034 = vpop.f32.mrb[0].mxu0
        %v1035 = vadd.f32 %v299, %v1034
        %1036 = vmatprep.mubr.f32.mxu0 0.0
        %1037 = vmatmul.mubr.f32.gmra.mrb[0].mxu0 %v330
        %v1038 = vpop.f32.mrb[0].mxu0
        %v1039 = vadd.f32 %v304, %v1038
        %v1040 = vpop.f32.mrb[0].mxu0
        %v1041 = vadd.f32 %v304, %v1040
        %1042 = vmatprep.mubr.f32.mxu0 0.0
        %1043 = vmatmul.mubr.f32.gmra.mrb[0].mxu0 %v332
        %v1044 = vpop.f32.mrb[0].mxu0
        %v1045 = vadd.f32 %v309, %v1044
        %v1046 = vpop.f32.mrb[0].mxu0
        %v1047 = vadd.f32 %v309, %v1046
        %1048 = vmatprep.mubr.f32.mxu0 0.0
        %1049 = vmatmul.mubr.f32.gmra.mrb[0].mxu0 %v334
        %v1050 = vpop.f32.mrb[0].mxu0
        %v1051 = vadd.f32 %v314, %v1050
        %v1052 = vpop.f32.mrb[0].mxu0
        %v1053 = vadd.f32 %v314, %v1052
        %1054 = vmatprep.mubr.f32.mxu0 0.0
        %1055 = vmatmul.mubr.f32.gmra.mrb[0].mxu0 %v336
        %v1056 = vpop.f32.mrb[0].mxu0
        %v1057 = vadd.f32 %v319, %v1056
        %v1058 = vpop.f32.mrb[0].mxu0
        %v1059 = vadd.f32 %v319, %v1058
        %1060 = vdwg.mxu0
        %1061 = vmatprep.subr.mxu0 0.0
        %1062 = vmatpush1.xpose.msra.mxu0 %v627
        %1063 = vmatprep.subr.mxu0 0.0
        %1064 = vmatpush1.xpose.msra.mxu0 %v630
        %1065 = vmatprep.subr.mxu0 0.0
        %1066 = vmatpush1.xpose.msra.mxu0 %v633
        %1067 = vmatprep.subr.mxu0 0.0
        %1068 = vmatpush1.xpose.msra.mxu0 %v636
        %1069 = vmatprep.subr.mxu0 0.0
        %1070 = vmatpush1.xpose.msra.mxu0 %v639
        %1071 = vmatprep.subr.mxu0 0.0
        %1072 = vmatpush1.xpose.msra.mxu0 %v642
        %1073 = vmatprep.subr.mxu0 0.0
        %1074 = vmatpush1.xpose.msra.mxu0 %v645
        %1075 = vmatprep.subr.mxu0 0.0
        %1076 = vmatpush1.xpose.msra.mxu0 %v648
        %1077 = vmatprep.subr.mxu0 0.0
        %1078 = vmatpush1.xpose.msra.mxu0 %v651
        %1079 = vmatprep.subr.mxu0 0.0
        %1080 = vmatpush1.xpose.msra.mxu0 %v654
        %1081 = vmatprep.subr.mxu0 0.0
        %1082 = vmatpush1.xpose.msra.mxu0 %v657
        %1083 = vmatprep.subr.mxu0 0.0
        %1084 = vmatpush1.xpose.msra.mxu0 %v660
        %1085 = vmatprep.subr.mxu0 0.0
        %1086 = vmatpush1.xpose.msra.mxu0 %v663
        %1087 = vmatprep.subr.mxu0 0.0
        %1088 = vmatpush1.xpose.msra.mxu0 %v666
        %1089 = vmatprep.subr.mxu0 0.0
        %1090 = vmatpush1.xpose.msra.mxu0 %v669
        %1091 = vmatprep.subr.mxu0 0.0
        %1092 = vmatpush1.xpose.msra.mxu0 %v672
        %1093 = vmatprep.subr.mxu0 0.0
        %1094 = vmatpush1.xpose.msra.mxu0 %v675
        %1095 = vmatprep.subr.mxu0 0.0
        %1096 = vmatpush1.xpose.msra.mxu0 %v678
        %1097 = vmatprep.subr.mxu0 0.0
        %1098 = vmatpush1.xpose.msra.mxu0 %v681
        %1099 = vmatprep.subr.mxu0 0.0
        %1100 = vmatpush1.xpose.msra.mxu0 %v684
        %1101 = vmatprep.subr.mxu0 0.0
        %1102 = vmatpush1.xpose.msra.mxu0 %v687
        %1103 = vmatprep.subr.mxu0 0.0
        %1104 = vmatpush1.xpose.msra.mxu0 %v690
        %1105 = vmatprep.subr.mxu0 0.0
        %1106 = vmatpush1.xpose.msra.mxu0 %v693
        %1107 = vmatprep.subr.mxu0 0.0
        %1108 = vmatpush1.xpose.msra.mxu0 %v696
        %1109 = vmatprep.subr.mxu0 0.0
        %1110 = vmatpush1.xpose.msra.mxu0 %v699
        %1111 = vmatprep.subr.mxu0 0.0
        %1112 = vmatpush1.xpose.msra.mxu0 %v702
        %1113 = vmatprep.subr.mxu0 0.0
        %1114 = vmatpush1.xpose.msra.mxu0 %v705
        %1115 = vmatprep.subr.mxu0 0.0
        %1116 = vmatpush1.xpose.msra.mxu0 %v708
        %1117 = vmatprep.subr.mxu0 0.0
        %1118 = vmatpush1.xpose.msra.mxu0 %v711
        %1119 = vmatprep.subr.mxu0 0.0
        %1120 = vmatpush1.xpose.msra.mxu0 %v714
        %1121 = vmatprep.subr.mxu0 0.0
        %1122 = vmatpush1.xpose.msra.mxu0 %v717
        %1123 = vmatprep.subr.mxu0 0.0
        %1124 = vmatpush1.xpose.msra.mxu0 %v720
        %1125 = vmatprep.mubr.f32.mxu0 0.0
        %1126 = vmatmul.mubr.f32.gmra.mrb[0].mxu0 %v322
        %v1127 = vpop.f32.mrb[0].mxu0
        %v1128 = vadd.f32 %v284, %v1127
        %v1129 = vpop.f32.mrb[0].mxu0
        %v1130 = vadd.f32 %v284, %v1129
        %1131 = vmatprep.mubr.f32.mxu0 0.0
        %1132 = vmatmul.mubr.f32.gmra.mrb[0].mxu0 %v324
        %v1133 = vpop.f32.mrb[0].mxu0
        %v1134 = vadd.f32 %v289, %v1133
        %v1135 = vpop.f32.mrb[0].mxu0
        %v1136 = vadd.f32 %v289, %v1135
        %1137 = vmatprep.mubr.f32.mxu0 0.0
        %1138 = vmatmul.mubr.f32.gmra.mrb[0].mxu0 %v326
        %v1139 = vpop.f32.mrb[0].mxu0
        %v1140 = vadd.f32 %v294, %v1139
        %v1141 = vpop.f32.mrb[0].mxu0
        %v1142 = vadd.f32 %v294, %v1141
        %1143 = vmatprep.mubr.f32.mxu0 0.0
        %1144 = vmatmul.mubr.f32.gmra.mrb[0].mxu0 %v328
        %v1145 = vpop.f32.mrb[0].mxu0
        %v1146 = vadd.f32 %v299, %v1145
        %v1147 = vpop.f32.mrb[0].mxu0
        %v1148 = vadd.f32 %v299, %v1147
        %1149 = vmatprep.mubr.f32.mxu0 0.0
        %1150 = vmatmul.mubr.f32.gmra.mrb[0].mxu0 %v330
        %v1151 = vpop.f32.mrb[0].mxu0
        %v1152 = vadd.f32 %v304, %v1151
        %v1153 = vpop.f32.mrb[0].mxu0
        %v1154 = vadd.f32 %v304, %v1153
        %1155 = vmatprep.mubr.f32.mxu0 0.0
        %1156 = vmatmul.mubr.f32.gmra.mrb[0].mxu0 %v332
        %v1157 = vpop.f32.mrb[0].mxu0
        %v1158 = vadd.f32 %v309, %v1157
        %v1159 = vpop.f32.mrb[0].mxu0
        %v1160 = vadd.f32 %v309, %v1159
        %1161 = vmatprep.mubr.f32.mxu0 0.0
        %1162 = vmatmul.mubr.f32.gmra.mrb[0].mxu0 %v334
        %v1163 = vpop.f32.mrb[0].mxu0
        %v1164 = vadd.f32 %v314, %v1163
        %v1165 = vpop.f32.mrb[0].mxu0
        %v1166 = vadd.f32 %v314, %v1165
        %1167 = vmatprep.mubr.f32.mxu0 0.0
        %1168 = vmatmul.mubr.f32.gmra.mrb[0].mxu0 %v336
        %v1169 = vpop.f32.mrb[0].mxu0
        %v1170 = vadd.f32 %v319, %v1169
        %v1171 = vpop.f32.mrb[0].mxu0
        %v1172 = vadd.f32 %v319, %v1171
        %1173 = vdwg.mxu0
        %v1174 = vmax.f32 %v789, 0.0
        %v1175 = vmax.f32 %v791, 0.0
        %v1176 = vmax.f32 %v902, 0.0
        %v1177 = vmax.f32 %v904, 0.0
        %v1178 = vmax.f32 %v1015, 0.0
        %v1179 = vmax.f32 %v1017, 0.0
        %v1180 = vmax.f32 %v1128, 0.0
        %v1181 = vmax.f32 %v1130, 0.0
        %v1182 = vmax.f32 %v795, 0.0
        %v1183 = vmax.f32 %v797, 0.0
        %v1184 = vmax.f32 %v908, 0.0
        %v1185 = vmax.f32 %v910, 0.0
        %v1186 = vmax.f32 %v1021, 0.0
        %v1187 = vmax.f32 %v1023, 0.0
        %v1188 = vmax.f32 %v1134, 0.0
        %v1189 = vmax.f32 %v1136, 0.0
        %v1190 = vmax.f32 %v801, 0.0
        %v1191 = vmax.f32 %v803, 0.0
        %v1192 = vmax.f32 %v914, 0.0
        %v1193 = vmax.f32 %v916, 0.0
        %v1194 = vmax.f32 %v1027, 0.0
        %v1195 = vmax.f32 %v1029, 0.0
        %v1196 = vmax.f32 %v1140, 0.0
        %v1197 = vmax.f32 %v1142, 0.0
        %v1198 = vmax.f32 %v807, 0.0
        %v1199 = vmax.f32 %v809, 0.0
        %v1200 = vmax.f32 %v920, 0.0
        %v1201 = vmax.f32 %v922, 0.0
        %v1202 = vmax.f32 %v1033, 0.0
        %v1203 = vmax.f32 %v1035, 0.0
        %v1204 = vmax.f32 %v1146, 0.0
        %v1205 = vmax.f32 %v1148, 0.0
        %v1206 = vmax.f32 %v813, 0.0
        %v1207 = vmax.f32 %v815, 0.0
        %v1208 = vmax.f32 %v926, 0.0
        %v1209 = vmax.f32 %v928, 0.0
        %v1210 = vmax.f32 %v1039, 0.0
        %v1211 = vmax.f32 %v1041, 0.0
        %v1212 = vmax.f32 %v1152, 0.0
        %v1213 = vmax.f32 %v1154, 0.0
        %v1214 = vmax.f32 %v819, 0.0
        %v1215 = vmax.f32 %v821, 0.0
        %v1216 = vmax.f32 %v932, 0.0
        %v1217 = vmax.f32 %v934, 0.0
        %v1218 = vmax.f32 %v1045, 0.0
        %v1219 = vmax.f32 %v1047, 0.0
        %v1220 = vmax.f32 %v1158, 0.0
        %v1221 = vmax.f32 %v1160, 0.0
        %v1222 = vmax.f32 %v825, 0.0
        %v1223 = vmax.f32 %v827, 0.0
        %v1224 = vmax.f32 %v938, 0.0
        %v1225 = vmax.f32 %v940, 0.0
        %v1226 = vmax.f32 %v1051, 0.0
        %v1227 = vmax.f32 %v1053, 0.0
        %v1228 = vmax.f32 %v1164, 0.0
        %v1229 = vmax.f32 %v1166, 0.0
        %v1230 = vmax.f32 %v831, 0.0
        %v1231 = vmax.f32 %v833, 0.0
        %v1232 = vmax.f32 %v944, 0.0
        %v1233 = vmax.f32 %v946, 0.0
        %v1234 = vmax.f32 %v1057, 0.0
        %v1235 = vmax.f32 %v1059, 0.0
        %v1236 = vmax.f32 %v1170, 0.0
        %v1237 = vmax.f32 %v1172, 0.0
        %v1238 = vld [vmem:[%s1 + $0x40] sm:$0xff]
        %v1239 = vld [vmem:[%s1 + $0x48] sm:$0xff]
        %v1240 = vld [vmem:[%s1 + $0x50] sm:$0xff]
        %v1241 = vld [vmem:[%s1 + $0x58] sm:$0xff]
        %1243 = vset.pattern.permute.xlu0 127
        %1244 = vperm.xlu0 %1243, %v1238
        %v1245 = vpop.permute.xlu0 %1244
        %1248 = vset.pattern.permute.xlu0 127
        %1249 = vperm.xlu0 %1248, %v1239
        %v1250 = vpop.permute.xlu0 %1249
        %1253 = vset.pattern.permute.xlu0 127
        %1254 = vperm.xlu0 %1253, %v1240
        %v1255 = vpop.permute.xlu0 %1254
        %1258 = vset.pattern.permute.xlu0 127
        %1259 = vperm.xlu0 %1258, %v1241
        %v1260 = vpop.permute.xlu0 %1259
        %vm1262 = vcmask 523264
        %v1263 = vsel %vm1262, %v1238, 0
        %v1265 = vsel %vm1262, %v1239, 0
        %v1267 = vsel %vm1262, %v1240, 0
        %v1269 = vsel %vm1262, %v1241, 0
        %1271 = vmatprep.subr.mxu0 %v1175
        %1272 = vmatpush1.msra.mxu0 %v1174
        %1273 = vmatprep.subr.mxu0 %v1183
        %1274 = vmatpush1.msra.mxu0 %v1182
        %1275 = vmatprep.subr.mxu0 %v1191
        %1276 = vmatpush1.msra.mxu0 %v1190
        %1277 = vmatprep.subr.mxu0 %v1199
        %1278 = vmatpush1.msra.mxu0 %v1198
        %1279 = vmatprep.subr.mxu0 %v1207
        %1280 = vmatpush1.msra.mxu0 %v1206
        %1281 = vmatprep.subr.mxu0 %v1215
        %1282 = vmatpush1.msra.mxu0 %v1214
        %1283 = vmatprep.subr.mxu0 %v1223
        %1284 = vmatpush1.msra.mxu0 %v1222
        %1285 = vmatprep.subr.mxu0 %v1231
        %1286 = vmatpush1.msra.mxu0 %v1230
        %1287 = vmatprep.subr.mxu0 0.0
        %1288 = vmatpush1.msra.mxu0 0.0
        %1289 = vmatprep.subr.mxu0 0.0
        %1290 = vmatpush1.msra.mxu0 0.0
        %1291 = vmatprep.subr.mxu0 0.0
        %1292 = vmatpush1.msra.mxu0 0.0
        %1293 = vmatprep.subr.mxu0 0.0
        %1294 = vmatpush1.msra.mxu0 0.0
        %1295 = vmatprep.subr.mxu0 0.0
        %1296 = vmatpush1.msra.mxu0 0.0
        %1297 = vmatprep.subr.mxu0 0.0
        %1298 = vmatpush1.msra.mxu0 0.0
        %1299 = vmatprep.subr.mxu0 0.0
        %1300 = vmatpush1.msra.mxu0 0.0
        %1301 = vmatprep.subr.mxu0 0.0
        %1302 = vmatpush1.msra.mxu0 0.0
        %1303 = vmatprep.subr.mxu0 0.0
        %1304 = vmatpush1.msra.mxu0 0.0
        %1305 = vmatprep.subr.mxu0 0.0
        %1306 = vmatpush1.msra.mxu0 0.0
        %1307 = vmatprep.subr.mxu0 0.0
        %1308 = vmatpush1.msra.mxu0 0.0
        %1309 = vmatprep.subr.mxu0 0.0
        %1310 = vmatpush1.msra.mxu0 0.0
        %1311 = vmatprep.subr.mxu0 0.0
        %1312 = vmatpush1.msra.mxu0 0.0
        %1313 = vmatprep.subr.mxu0 0.0
        %1314 = vmatpush1.msra.mxu0 0.0
        %1315 = vmatprep.subr.mxu0 0.0
        %1316 = vmatpush1.msra.mxu0 0.0
        %1317 = vmatprep.subr.mxu0 0.0
        %1318 = vmatpush1.msra.mxu0 0.0
        %1319 = vmatprep.subr.mxu0 0.0
        %1320 = vmatpush1.msra.mxu0 0.0
        %1321 = vmatprep.subr.mxu0 0.0
        %1322 = vmatpush1.msra.mxu0 0.0
        %1323 = vmatprep.subr.mxu0 0.0
        %1324 = vmatpush1.msra.mxu0 0.0
        %1325 = vmatprep.subr.mxu0 0.0
        %1326 = vmatpush1.msra.mxu0 0.0
        %1327 = vmatprep.subr.mxu0 0.0
        %1328 = vmatpush1.msra.mxu0 0.0
        %1329 = vmatprep.subr.mxu0 0.0
        %1330 = vmatpush1.msra.mxu0 0.0
        %1331 = vmatprep.subr.mxu0 0.0
        %1332 = vmatpush1.msra.mxu0 0.0
        %1333 = vmatprep.subr.mxu0 0.0
        %1334 = vmatpush1.msra.mxu0 0.0
        %1335 = vmatprep.mubr.f32.mxu0 0.0
        %1336 = vmatmul.mubr.f32.gmra.mrb[0].mxu0 %v1263
        %v1337 = vpop.f32.mrb[0].mxu0
        %v1338 = vadd.f32 %v1245, %v1337
        %v1339 = vpop.f32.mrb[0].mxu0
        %v1340 = vadd.f32 %v1245, %v1339
        %1341 = vmatprep.mubr.f32.mxu0 0.0
        %1342 = vmatmul.mubr.f32.gmra.mrb[0].mxu0 %v1265
        %v1343 = vpop.f32.mrb[0].mxu0
        %v1344 = vadd.f32 %v1250, %v1343
        %v1345 = vpop.f32.mrb[0].mxu0
        %v1346 = vadd.f32 %v1250, %v1345
        %1347 = vmatprep.mubr.f32.mxu0 0.0
        %1348 = vmatmul.mubr.f32.gmra.mrb[0].mxu0 %v1267
        %v1349 = vpop.f32.mrb[0].mxu0
        %v1350 = vadd.f32 %v1255, %v1349
        %v1351 = vpop.f32.mrb[0].mxu0
        %v1352 = vadd.f32 %v1255, %v1351
        %1353 = vmatprep.mubr.f32.mxu0 0.0
        %1354 = vmatmul.mubr.f32.gmra.mrb[0].mxu0 %v1269
        %v1355 = vpop.f32.mrb[0].mxu0
        %v1356 = vadd.f32 %v1260, %v1355
        %v1357 = vpop.f32.mrb[0].mxu0
        %v1358 = vadd.f32 %v1260, %v1357
        %1359 = vdwg.mxu0
        %1360 = vmatprep.subr.mxu0 %v1177
        %1361 = vmatpush1.msra.mxu0 %v1176
        %1362 = vmatprep.subr.mxu0 %v1185
        %1363 = vmatpush1.msra.mxu0 %v1184
        %1364 = vmatprep.subr.mxu0 %v1193
        %1365 = vmatpush1.msra.mxu0 %v1192
        %1366 = vmatprep.subr.mxu0 %v1201
        %1367 = vmatpush1.msra.mxu0 %v1200
        %1368 = vmatprep.subr.mxu0 %v1209
        %1369 = vmatpush1.msra.mxu0 %v1208
        %1370 = vmatprep.subr.mxu0 %v1217
        %1371 = vmatpush1.msra.mxu0 %v1216
        %1372 = vmatprep.subr.mxu0 %v1225
        %1373 = vmatpush1.msra.mxu0 %v1224
        %1374 = vmatprep.subr.mxu0 %v1233
        %1375 = vmatpush1.msra.mxu0 %v1232
        %1376 = vmatprep.subr.mxu0 0.0
        %1377 = vmatpush1.msra.mxu0 0.0
        %1378 = vmatprep.subr.mxu0 0.0
        %1379 = vmatpush1.msra.mxu0 0.0
        %1380 = vmatprep.subr.mxu0 0.0
        %1381 = vmatpush1.msra.mxu0 0.0
        %1382 = vmatprep.subr.mxu0 0.0
        %1383 = vmatpush1.msra.mxu0 0.0
        %1384 = vmatprep.subr.mxu0 0.0
        %1385 = vmatpush1.msra.mxu0 0.0
        %1386 = vmatprep.subr.mxu0 0.0
        %1387 = vmatpush1.msra.mxu0 0.0
        %1388 = vmatprep.subr.mxu0 0.0
        %1389 = vmatpush1.msra.mxu0 0.0
        %1390 = vmatprep.subr.mxu0 0.0
        %1391 = vmatpush1.msra.mxu0 0.0
        %1392 = vmatprep.subr.mxu0 0.0
        %1393 = vmatpush1.msra.mxu0 0.0
        %1394 = vmatprep.subr.mxu0 0.0
        %1395 = vmatpush1.msra.mxu0 0.0
        %1396 = vmatprep.subr.mxu0 0.0
        %1397 = vmatpush1.msra.mxu0 0.0
        %1398 = vmatprep.subr.mxu0 0.0
        %1399 = vmatpush1.msra.mxu0 0.0
        %1400 = vmatprep.subr.mxu0 0.0
        %1401 = vmatpush1.msra.mxu0 0.0
        %1402 = vmatprep.subr.mxu0 0.0
        %1403 = vmatpush1.msra.mxu0 0.0
        %1404 = vmatprep.subr.mxu0 0.0
        %1405 = vmatpush1.msra.mxu0 0.0
        %1406 = vmatprep.subr.mxu0 0.0
        %1407 = vmatpush1.msra.mxu0 0.0
        %1408 = vmatprep.subr.mxu0 0.0
        %1409 = vmatpush1.msra.mxu0 0.0
        %1410 = vmatprep.subr.mxu0 0.0
        %1411 = vmatpush1.msra.mxu0 0.0
        %1412 = vmatprep.subr.mxu0 0.0
        %1413 = vmatpush1.msra.mxu0 0.0
        %1414 = vmatprep.subr.mxu0 0.0
        %1415 = vmatpush1.msra.mxu0 0.0
        %1416 = vmatprep.subr.mxu0 0.0
        %1417 = vmatpush1.msra.mxu0 0.0
        %1418 = vmatprep.subr.mxu0 0.0
        %1419 = vmatpush1.msra.mxu0 0.0
        %1420 = vmatprep.subr.mxu0 0.0
        %1421 = vmatpush1.msra.mxu0 0.0
        %1422 = vmatprep.subr.mxu0 0.0
        %1423 = vmatpush1.msra.mxu0 0.0
        %1424 = vmatprep.mubr.f32.mxu0 0.0
        %1425 = vmatmul.mubr.f32.gmra.mrb[0].mxu0 %v1263
        %v1426 = vpop.f32.mrb[0].mxu0
        %v1427 = vadd.f32 %v1245, %v1426
        %v1428 = vpop.f32.mrb[0].mxu0
        %v1429 = vadd.f32 %v1245, %v1428
        %1430 = vmatprep.mubr.f32.mxu0 0.0
        %1431 = vmatmul.mubr.f32.gmra.mrb[0].mxu0 %v1265
        %v1432 = vpop.f32.mrb[0].mxu0
        %v1433 = vadd.f32 %v1250, %v1432
        %v1434 = vpop.f32.mrb[0].mxu0
        %v1435 = vadd.f32 %v1250, %v1434
        %1436 = vmatprep.mubr.f32.mxu0 0.0
        %1437 = vmatmul.mubr.f32.gmra.mrb[0].mxu0 %v1267
        %v1438 = vpop.f32.mrb[0].mxu0
        %v1439 = vadd.f32 %v1255, %v1438
        %v1440 = vpop.f32.mrb[0].mxu0
        %v1441 = vadd.f32 %v1255, %v1440
        %1442 = vmatprep.mubr.f32.mxu0 0.0
        %1443 = vmatmul.mubr.f32.gmra.mrb[0].mxu0 %v1269
        %v1444 = vpop.f32.mrb[0].mxu0
        %v1445 = vadd.f32 %v1260, %v1444
        %v1446 = vpop.f32.mrb[0].mxu0
        %v1447 = vadd.f32 %v1260, %v1446
        %1448 = vdwg.mxu0
        %1449 = vmatprep.subr.mxu0 %v1179
        %1450 = vmatpush1.msra.mxu0 %v1178
        %1451 = vmatprep.subr.mxu0 %v1187
        %1452 = vmatpush1.msra.mxu0 %v1186
        %1453 = vmatprep.subr.mxu0 %v1195
        %1454 = vmatpush1.msra.mxu0 %v1194
        %1455 = vmatprep.subr.mxu0 %v1203
        %1456 = vmatpush1.msra.mxu0 %v1202
        %1457 = vmatprep.subr.mxu0 %v1211
        %1458 = vmatpush1.msra.mxu0 %v1210
        %1459 = vmatprep.subr.mxu0 %v1219
        %1460 = vmatpush1.msra.mxu0 %v1218
        %1461 = vmatprep.subr.mxu0 %v1227
        %1462 = vmatpush1.msra.mxu0 %v1226
        %1463 = vmatprep.subr.mxu0 %v1235
        %1464 = vmatpush1.msra.mxu0 %v1234
        %1465 = vmatprep.subr.mxu0 0.0
        %1466 = vmatpush1.msra.mxu0 0.0
        %1467 = vmatprep.subr.mxu0 0.0
        %1468 = vmatpush1.msra.mxu0 0.0
        %1469 = vmatprep.subr.mxu0 0.0
        %1470 = vmatpush1.msra.mxu0 0.0
        %1471 = vmatprep.subr.mxu0 0.0
        %1472 = vmatpush1.msra.mxu0 0.0
        %1473 = vmatprep.subr.mxu0 0.0
        %1474 = vmatpush1.msra.mxu0 0.0
        %1475 = vmatprep.subr.mxu0 0.0
        %1476 = vmatpush1.msra.mxu0 0.0
        %1477 = vmatprep.subr.mxu0 0.0
        %1478 = vmatpush1.msra.mxu0 0.0
        %1479 = vmatprep.subr.mxu0 0.0
        %1480 = vmatpush1.msra.mxu0 0.0
        %1481 = vmatprep.subr.mxu0 0.0
        %1482 = vmatpush1.msra.mxu0 0.0
        %1483 = vmatprep.subr.mxu0 0.0
        %1484 = vmatpush1.msra.mxu0 0.0
        %1485 = vmatprep.subr.mxu0 0.0
        %1486 = vmatpush1.msra.mxu0 0.0
        %1487 = vmatprep.subr.mxu0 0.0
        %1488 = vmatpush1.msra.mxu0 0.0
        %1489 = vmatprep.subr.mxu0 0.0
        %1490 = vmatpush1.msra.mxu0 0.0
        %1491 = vmatprep.subr.mxu0 0.0
        %1492 = vmatpush1.msra.mxu0 0.0
        %1493 = vmatprep.subr.mxu0 0.0
        %1494 = vmatpush1.msra.mxu0 0.0
        %1495 = vmatprep.subr.mxu0 0.0
        %1496 = vmatpush1.msra.mxu0 0.0
        %1497 = vmatprep.subr.mxu0 0.0
        %1498 = vmatpush1.msra.mxu0 0.0
        %1499 = vmatprep.subr.mxu0 0.0
        %1500 = vmatpush1.msra.mxu0 0.0
        %1501 = vmatprep.subr.mxu0 0.0
        %1502 = vmatpush1.msra.mxu0 0.0
        %1503 = vmatprep.subr.mxu0 0.0
        %1504 = vmatpush1.msra.mxu0 0.0
        %1505 = vmatprep.subr.mxu0 0.0
        %1506 = vmatpush1.msra.mxu0 0.0
        %1507 = vmatprep.subr.mxu0 0.0
        %1508 = vmatpush1.msra.mxu0 0.0
        %1509 = vmatprep.subr.mxu0 0.0
        %1510 = vmatpush1.msra.mxu0 0.0
        %1511 = vmatprep.subr.mxu0 0.0
        %1512 = vmatpush1.msra.mxu0 0.0
        %1513 = vmatprep.mubr.f32.mxu0 0.0
        %1514 = vmatmul.mubr.f32.gmra.mrb[0].mxu0 %v1263
        %v1515 = vpop.f32.mrb[0].mxu0
        %v1516 = vadd.f32 %v1245, %v1515
        %v1517 = vpop.f32.mrb[0].mxu0
        %v1518 = vadd.f32 %v1245, %v1517
        %1519 = vmatprep.mubr.f32.mxu0 0.0
        %1520 = vmatmul.mubr.f32.gmra.mrb[0].mxu0 %v1265
        %v1521 = vpop.f32.mrb[0].mxu0
        %v1522 = vadd.f32 %v1250, %v1521
        %v1523 = vpop.f32.mrb[0].mxu0
        %v1524 = vadd.f32 %v1250, %v1523
        %1525 = vmatprep.mubr.f32.mxu0 0.0
        %1526 = vmatmul.mubr.f32.gmra.mrb[0].mxu0 %v1267
        %v1527 = vpop.f32.mrb[0].mxu0
        %v1528 = vadd.f32 %v1255, %v1527
        %v1529 = vpop.f32.mrb[0].mxu0
        %v1530 = vadd.f32 %v1255, %v1529
        %1531 = vmatprep.mubr.f32.mxu0 0.0
        %1532 = vmatmul.mubr.f32.gmra.mrb[0].mxu0 %v1269
        %v1533 = vpop.f32.mrb[0].mxu0
        %v1534 = vadd.f32 %v1260, %v1533
        %v1535 = vpop.f32.mrb[0].mxu0
        %v1536 = vadd.f32 %v1260, %v1535
        %1537 = vdwg.mxu0
        %1538 = vmatprep.subr.mxu0 %v1181
        %1539 = vmatpush1.msra.mxu0 %v1180
        %1540 = vmatprep.subr.mxu0 %v1189
        %1541 = vmatpush1.msra.mxu0 %v1188
        %1542 = vmatprep.subr.mxu0 %v1197
        %1543 = vmatpush1.msra.mxu0 %v1196
        %1544 = vmatprep.subr.mxu0 %v1205
        %1545 = vmatpush1.msra.mxu0 %v1204
        %1546 = vmatprep.subr.mxu0 %v1213
        %1547 = vmatpush1.msra.mxu0 %v1212
        %1548 = vmatprep.subr.mxu0 %v1221
        %1549 = vmatpush1.msra.mxu0 %v1220
        %1550 = vmatprep.subr.mxu0 %v1229
        %1551 = vmatpush1.msra.mxu0 %v1228
        %1552 = vmatprep.subr.mxu0 %v1237
        %1553 = vmatpush1.msra.mxu0 %v1236
        %1554 = vmatprep.subr.mxu0 0.0
        %1555 = vmatpush1.msra.mxu0 0.0
        %1556 = vmatprep.subr.mxu0 0.0
        %1557 = vmatpush1.msra.mxu0 0.0
        %1558 = vmatprep.subr.mxu0 0.0
        %1559 = vmatpush1.msra.mxu0 0.0
        %1560 = vmatprep.subr.mxu0 0.0
        %1561 = vmatpush1.msra.mxu0 0.0
        %1562 = vmatprep.subr.mxu0 0.0
        %1563 = vmatpush1.msra.mxu0 0.0
        %1564 = vmatprep.subr.mxu0 0.0
        %1565 = vmatpush1.msra.mxu0 0.0
        %1566 = vmatprep.subr.mxu0 0.0
        %1567 = vmatpush1.msra.mxu0 0.0
        %1568 = vmatprep.subr.mxu0 0.0
        %1569 = vmatpush1.msra.mxu0 0.0
        %1570 = vmatprep.subr.mxu0 0.0
        %1571 = vmatpush1.msra.mxu0 0.0
        %1572 = vmatprep.subr.mxu0 0.0
        %1573 = vmatpush1.msra.mxu0 0.0
        %1574 = vmatprep.subr.mxu0 0.0
        %1575 = vmatpush1.msra.mxu0 0.0
        %1576 = vmatprep.subr.mxu0 0.0
        %1577 = vmatpush1.msra.mxu0 0.0
        %1578 = vmatprep.subr.mxu0 0.0
        %1579 = vmatpush1.msra.mxu0 0.0
        %1580 = vmatprep.subr.mxu0 0.0
        %1581 = vmatpush1.msra.mxu0 0.0
        %1582 = vmatprep.subr.mxu0 0.0
        %1583 = vmatpush1.msra.mxu0 0.0
        %1584 = vmatprep.subr.mxu0 0.0
        %1585 = vmatpush1.msra.mxu0 0.0
        %1586 = vmatprep.subr.mxu0 0.0
        %1587 = vmatpush1.msra.mxu0 0.0
        %1588 = vmatprep.subr.mxu0 0.0
        %1589 = vmatpush1.msra.mxu0 0.0
        %1590 = vmatprep.subr.mxu0 0.0
        %1591 = vmatpush1.msra.mxu0 0.0
        %1592 = vmatprep.subr.mxu0 0.0
        %1593 = vmatpush1.msra.mxu0 0.0
        %1594 = vmatprep.subr.mxu0 0.0
        %1595 = vmatpush1.msra.mxu0 0.0
        %1596 = vmatprep.subr.mxu0 0.0
        %1597 = vmatpush1.msra.mxu0 0.0
        %1598 = vmatprep.subr.mxu0 0.0
        %1599 = vmatpush1.msra.mxu0 0.0
        %1600 = vmatprep.subr.mxu0 0.0
        %1601 = vmatpush1.msra.mxu0 0.0
        %1602 = vmatprep.mubr.f32.mxu0 0.0
        %1603 = vmatmul.mubr.f32.gmra.mrb[0].mxu0 %v1263
        %v1604 = vpop.f32.mrb[0].mxu0
        %v1605 = vadd.f32 %v1245, %v1604
        %v1606 = vpop.f32.mrb[0].mxu0
        %v1607 = vadd.f32 %v1245, %v1606
        %1608 = vmatprep.mubr.f32.mxu0 0.0
        %1609 = vmatmul.mubr.f32.gmra.mrb[0].mxu0 %v1265
        %v1610 = vpop.f32.mrb[0].mxu0
        %v1611 = vadd.f32 %v1250, %v1610
        %v1612 = vpop.f32.mrb[0].mxu0
        %v1613 = vadd.f32 %v1250, %v1612
        %1614 = vmatprep.mubr.f32.mxu0 0.0
        %1615 = vmatmul.mubr.f32.gmra.mrb[0].mxu0 %v1267
        %v1616 = vpop.f32.mrb[0].mxu0
        %v1617 = vadd.f32 %v1255, %v1616
        %v1618 = vpop.f32.mrb[0].mxu0
        %v1619 = vadd.f32 %v1255, %v1618
        %1620 = vmatprep.mubr.f32.mxu0 0.0
        %1621 = vmatmul.mubr.f32.gmra.mrb[0].mxu0 %v1269
        %v1622 = vpop.f32.mrb[0].mxu0
        %v1623 = vadd.f32 %v1260, %v1622
        %v1624 = vpop.f32.mrb[0].mxu0
        %v1625 = vadd.f32 %v1260, %v1624
        %1626 = vdwg.mxu0
        %v1627 = vmax.f32 %v1338, 0.0
        %v1628 = vmax.f32 %v1340, 0.0
        %v1629 = vmax.f32 %v1427, 0.0
        %v1630 = vmax.f32 %v1429, 0.0
        %v1631 = vmax.f32 %v1516, 0.0
        %v1632 = vmax.f32 %v1518, 0.0
        %v1633 = vmax.f32 %v1605, 0.0
        %v1634 = vmax.f32 %v1607, 0.0
        %v1635 = vmax.f32 %v1344, 0.0
        %v1636 = vmax.f32 %v1346, 0.0
        %v1637 = vmax.f32 %v1433, 0.0
        %v1638 = vmax.f32 %v1435, 0.0
        %v1639 = vmax.f32 %v1522, 0.0
        %v1640 = vmax.f32 %v1524, 0.0
        %v1641 = vmax.f32 %v1611, 0.0
        %v1642 = vmax.f32 %v1613, 0.0
        %v1643 = vmax.f32 %v1350, 0.0
        %v1644 = vmax.f32 %v1352, 0.0
        %v1645 = vmax.f32 %v1439, 0.0
        %v1646 = vmax.f32 %v1441, 0.0
        %v1647 = vmax.f32 %v1528, 0.0
        %v1648 = vmax.f32 %v1530, 0.0
        %v1649 = vmax.f32 %v1617, 0.0
        %v1650 = vmax.f32 %v1619, 0.0
        %v1651 = vmax.f32 %v1356, 0.0
        %v1652 = vmax.f32 %v1358, 0.0
        %v1653 = vmax.f32 %v1445, 0.0
        %v1654 = vmax.f32 %v1447, 0.0
        %v1655 = vmax.f32 %v1534, 0.0
        %v1656 = vmax.f32 %v1536, 0.0
        %v1657 = vmax.f32 %v1623, 0.0
        %v1658 = vmax.f32 %v1625, 0.0
        %v1659 = vld [vmem:[%s1 + $0x60] sm:$0xff]
        %v1660 = vld [vmem:[%s1 + $0x68] sm:$0xff]
        %1662 = vset.pattern.permute.xlu0 127
        %1663 = vperm.xlu0 %1662, %v1659
        %v1664 = vpop.permute.xlu0 %1663
        %1667 = vset.pattern.permute.xlu0 127
        %1668 = vperm.xlu0 %1667, %v1660
        %v1669 = vpop.permute.xlu0 %1668
        %vm1671 = vcmask 261120
        %v1672 = vsel %vm1671, %v1659, 0
        %v1674 = vsel %vm1671, %v1660, 0
        %1676 = vmatprep.subr.mxu0 %v1628
        %1677 = vmatpush1.msra.mxu0 %v1627
        %1678 = vmatprep.subr.mxu0 %v1636
        %1679 = vmatpush1.msra.mxu0 %v1635
        %1680 = vmatprep.subr.mxu0 %v1644
        %1681 = vmatpush1.msra.mxu0 %v1643
        %1682 = vmatprep.subr.mxu0 %v1652
        %1683 = vmatpush1.msra.mxu0 %v1651
        %1684 = vmatprep.subr.mxu0 0.0
        %1685 = vmatpush1.msra.mxu0 0.0
        %1686 = vmatprep.subr.mxu0 0.0
        %1687 = vmatpush1.msra.mxu0 0.0
        %1688 = vmatprep.subr.mxu0 0.0
        %1689 = vmatpush1.msra.mxu0 0.0
        %1690 = vmatprep.subr.mxu0 0.0
        %1691 = vmatpush1.msra.mxu0 0.0
        %1692 = vmatprep.subr.mxu0 0.0
        %1693 = vmatpush1.msra.mxu0 0.0
        %1694 = vmatprep.subr.mxu0 0.0
        %1695 = vmatpush1.msra.mxu0 0.0
        %1696 = vmatprep.subr.mxu0 0.0
        %1697 = vmatpush1.msra.mxu0 0.0
        %1698 = vmatprep.subr.mxu0 0.0
        %1699 = vmatpush1.msra.mxu0 0.0
        %1700 = vmatprep.subr.mxu0 0.0
        %1701 = vmatpush1.msra.mxu0 0.0
        %1702 = vmatprep.subr.mxu0 0.0
        %1703 = vmatpush1.msra.mxu0 0.0
        %1704 = vmatprep.subr.mxu0 0.0
        %1705 = vmatpush1.msra.mxu0 0.0
        %1706 = vmatprep.subr.mxu0 0.0
        %1707 = vmatpush1.msra.mxu0 0.0
        %1708 = vmatprep.subr.mxu0 0.0
        %1709 = vmatpush1.msra.mxu0 0.0
        %1710 = vmatprep.subr.mxu0 0.0
        %1711 = vmatpush1.msra.mxu0 0.0
        %1712 = vmatprep.subr.mxu0 0.0
        %1713 = vmatpush1.msra.mxu0 0.0
        %1714 = vmatprep.subr.mxu0 0.0
        %1715 = vmatpush1.msra.mxu0 0.0
        %1716 = vmatprep.subr.mxu0 0.0
        %1717 = vmatpush1.msra.mxu0 0.0
        %1718 = vmatprep.subr.mxu0 0.0
        %1719 = vmatpush1.msra.mxu0 0.0
        %1720 = vmatprep.subr.mxu0 0.0
        %1721 = vmatpush1.msra.mxu0 0.0
        %1722 = vmatprep.subr.mxu0 0.0
        %1723 = vmatpush1.msra.mxu0 0.0
        %1724 = vmatprep.subr.mxu0 0.0
        %1725 = vmatpush1.msra.mxu0 0.0
        %1726 = vmatprep.subr.mxu0 0.0
        %1727 = vmatpush1.msra.mxu0 0.0
        %1728 = vmatprep.subr.mxu0 0.0
        %1729 = vmatpush1.msra.mxu0 0.0
        %1730 = vmatprep.subr.mxu0 0.0
        %1731 = vmatpush1.msra.mxu0 0.0
        %1732 = vmatprep.subr.mxu0 0.0
        %1733 = vmatpush1.msra.mxu0 0.0
        %1734 = vmatprep.subr.mxu0 0.0
        %1735 = vmatpush1.msra.mxu0 0.0
        %1736 = vmatprep.subr.mxu0 0.0
        %1737 = vmatpush1.msra.mxu0 0.0
        %1738 = vmatprep.subr.mxu0 0.0
        %1739 = vmatpush1.msra.mxu0 0.0
        %1740 = vmatprep.mubr.f32.mxu0 0.0
        %1741 = vmatmul.mubr.f32.gmra.mrb[0].mxu0 %v1672
        %v1742 = vpop.f32.mrb[0].mxu0
        %v1743 = vadd.f32 %v1664, %v1742
        %v1744 = vpop.f32.mrb[0].mxu0
        %v1745 = vadd.f32 %v1664, %v1744
        %1746 = vmatprep.mubr.f32.mxu0 0.0
        %1747 = vmatmul.mubr.f32.gmra.mrb[0].mxu0 %v1674
        %v1748 = vpop.f32.mrb[0].mxu0
        %v1749 = vadd.f32 %v1669, %v1748
        %v1750 = vpop.f32.mrb[0].mxu0
        %v1751 = vadd.f32 %v1669, %v1750
        %1752 = vdwg.mxu0
        %1753 = vmatprep.subr.mxu0 %v1630
        %1754 = vmatpush1.msra.mxu0 %v1629
        %1755 = vmatprep.subr.mxu0 %v1638
        %1756 = vmatpush1.msra.mxu0 %v1637
        %1757 = vmatprep.subr.mxu0 %v1646
        %1758 = vmatpush1.msra.mxu0 %v1645
        %1759 = vmatprep.subr.mxu0 %v1654
        %1760 = vmatpush1.msra.mxu0 %v1653
        %1761 = vmatprep.subr.mxu0 0.0
        %1762 = vmatpush1.msra.mxu0 0.0
        %1763 = vmatprep.subr.mxu0 0.0
        %1764 = vmatpush1.msra.mxu0 0.0
        %1765 = vmatprep.subr.mxu0 0.0
        %1766 = vmatpush1.msra.mxu0 0.0
        %1767 = vmatprep.subr.mxu0 0.0
        %1768 = vmatpush1.msra.mxu0 0.0
        %1769 = vmatprep.subr.mxu0 0.0
        %1770 = vmatpush1.msra.mxu0 0.0
        %1771 = vmatprep.subr.mxu0 0.0
        %1772 = vmatpush1.msra.mxu0 0.0
        %1773 = vmatprep.subr.mxu0 0.0
        %1774 = vmatpush1.msra.mxu0 0.0
        %1775 = vmatprep.subr.mxu0 0.0
        %1776 = vmatpush1.msra.mxu0 0.0
        %1777 = vmatprep.subr.mxu0 0.0
        %1778 = vmatpush1.msra.mxu0 0.0
        %1779 = vmatprep.subr.mxu0 0.0
        %1780 = vmatpush1.msra.mxu0 0.0
        %1781 = vmatprep.subr.mxu0 0.0
        %1782 = vmatpush1.msra.mxu0 0.0
        %1783 = vmatprep.subr.mxu0 0.0
        %1784 = vmatpush1.msra.mxu0 0.0
        %1785 = vmatprep.subr.mxu0 0.0
        %1786 = vmatpush1.msra.mxu0 0.0
        %1787 = vmatprep.subr.mxu0 0.0
        %1788 = vmatpush1.msra.mxu0 0.0
        %1789 = vmatprep.subr.mxu0 0.0
        %1790 = vmatpush1.msra.mxu0 0.0
        %1791 = vmatprep.subr.mxu0 0.0
        %1792 = vmatpush1.msra.mxu0 0.0
        %1793 = vmatprep.subr.mxu0 0.0
        %1794 = vmatpush1.msra.mxu0 0.0
        %1795 = vmatprep.subr.mxu0 0.0
        %1796 = vmatpush1.msra.mxu0 0.0
        %1797 = vmatprep.subr.mxu0 0.0
        %1798 = vmatpush1.msra.mxu0 0.0
        %1799 = vmatprep.subr.mxu0 0.0
        %1800 = vmatpush1.msra.mxu0 0.0
        %1801 = vmatprep.subr.mxu0 0.0
        %1802 = vmatpush1.msra.mxu0 0.0
        %1803 = vmatprep.subr.mxu0 0.0
        %1804 = vmatpush1.msra.mxu0 0.0
        %1805 = vmatprep.subr.mxu0 0.0
        %1806 = vmatpush1.msra.mxu0 0.0
        %1807 = vmatprep.subr.mxu0 0.0
        %1808 = vmatpush1.msra.mxu0 0.0
        %1809 = vmatprep.subr.mxu0 0.0
        %1810 = vmatpush1.msra.mxu0 0.0
        %1811 = vmatprep.subr.mxu0 0.0
        %1812 = vmatpush1.msra.mxu0 0.0
        %1813 = vmatprep.subr.mxu0 0.0
        %1814 = vmatpush1.msra.mxu0 0.0
        %1815 = vmatprep.subr.mxu0 0.0
        %1816 = vmatpush1.msra.mxu0 0.0
        %1817 = vmatprep.mubr.f32.mxu0 0.0
        %1818 = vmatmul.mubr.f32.gmra.mrb[0].mxu0 %v1672
        %v1819 = vpop.f32.mrb[0].mxu0
        %v1820 = vadd.f32 %v1664, %v1819
        %v1821 = vpop.f32.mrb[0].mxu0
        %v1822 = vadd.f32 %v1664, %v1821
        %1823 = vmatprep.mubr.f32.mxu0 0.0
        %1824 = vmatmul.mubr.f32.gmra.mrb[0].mxu0 %v1674
        %v1825 = vpop.f32.mrb[0].mxu0
        %v1826 = vadd.f32 %v1669, %v1825
        %v1827 = vpop.f32.mrb[0].mxu0
        %v1828 = vadd.f32 %v1669, %v1827
        %1829 = vdwg.mxu0
        %1830 = vmatprep.subr.mxu0 %v1632
        %1831 = vmatpush1.msra.mxu0 %v1631
        %1832 = vmatprep.subr.mxu0 %v1640
        %1833 = vmatpush1.msra.mxu0 %v1639
        %1834 = vmatprep.subr.mxu0 %v1648
        %1835 = vmatpush1.msra.mxu0 %v1647
        %1836 = vmatprep.subr.mxu0 %v1656
        %1837 = vmatpush1.msra.mxu0 %v1655
        %1838 = vmatprep.subr.mxu0 0.0
        %1839 = vmatpush1.msra.mxu0 0.0
        %1840 = vmatprep.subr.mxu0 0.0
        %1841 = vmatpush1.msra.mxu0 0.0
        %1842 = vmatprep.subr.mxu0 0.0
        %1843 = vmatpush1.msra.mxu0 0.0
        %1844 = vmatprep.subr.mxu0 0.0
        %1845 = vmatpush1.msra.mxu0 0.0
        %1846 = vmatprep.subr.mxu0 0.0
        %1847 = vmatpush1.msra.mxu0 0.0
        %1848 = vmatprep.subr.mxu0 0.0
        %1849 = vmatpush1.msra.mxu0 0.0
        %1850 = vmatprep.subr.mxu0 0.0
        %1851 = vmatpush1.msra.mxu0 0.0
        %1852 = vmatprep.subr.mxu0 0.0
        %1853 = vmatpush1.msra.mxu0 0.0
        %1854 = vmatprep.subr.mxu0 0.0
        %1855 = vmatpush1.msra.mxu0 0.0
        %1856 = vmatprep.subr.mxu0 0.0
        %1857 = vmatpush1.msra.mxu0 0.0
        %1858 = vmatprep.subr.mxu0 0.0
        %1859 = vmatpush1.msra.mxu0 0.0
        %1860 = vmatprep.subr.mxu0 0.0
        %1861 = vmatpush1.msra.mxu0 0.0
        %1862 = vmatprep.subr.mxu0 0.0
        %1863 = vmatpush1.msra.mxu0 0.0
        %1864 = vmatprep.subr.mxu0 0.0
        %1865 = vmatpush1.msra.mxu0 0.0
        %1866 = vmatprep.subr.mxu0 0.0
        %1867 = vmatpush1.msra.mxu0 0.0
        %1868 = vmatprep.subr.mxu0 0.0
        %1869 = vmatpush1.msra.mxu0 0.0
        %1870 = vmatprep.subr.mxu0 0.0
        %1871 = vmatpush1.msra.mxu0 0.0
        %1872 = vmatprep.subr.mxu0 0.0
        %1873 = vmatpush1.msra.mxu0 0.0
        %1874 = vmatprep.subr.mxu0 0.0
        %1875 = vmatpush1.msra.mxu0 0.0
        %1876 = vmatprep.subr.mxu0 0.0
        %1877 = vmatpush1.msra.mxu0 0.0
        %1878 = vmatprep.subr.mxu0 0.0
        %1879 = vmatpush1.msra.mxu0 0.0
        %1880 = vmatprep.subr.mxu0 0.0
        %1881 = vmatpush1.msra.mxu0 0.0
        %1882 = vmatprep.subr.mxu0 0.0
        %1883 = vmatpush1.msra.mxu0 0.0
        %1884 = vmatprep.subr.mxu0 0.0
        %1885 = vmatpush1.msra.mxu0 0.0
        %1886 = vmatprep.subr.mxu0 0.0
        %1887 = vmatpush1.msra.mxu0 0.0
        %1888 = vmatprep.subr.mxu0 0.0
        %1889 = vmatpush1.msra.mxu0 0.0
        %1890 = vmatprep.subr.mxu0 0.0
        %1891 = vmatpush1.msra.mxu0 0.0
        %1892 = vmatprep.subr.mxu0 0.0
        %1893 = vmatpush1.msra.mxu0 0.0
        %1894 = vmatprep.mubr.f32.mxu0 0.0
        %1895 = vmatmul.mubr.f32.gmra.mrb[0].mxu0 %v1672
        %v1896 = vpop.f32.mrb[0].mxu0
        %v1897 = vadd.f32 %v1664, %v1896
        %v1898 = vpop.f32.mrb[0].mxu0
        %v1899 = vadd.f32 %v1664, %v1898
        %1900 = vmatprep.mubr.f32.mxu0 0.0
        %1901 = vmatmul.mubr.f32.gmra.mrb[0].mxu0 %v1674
        %v1902 = vpop.f32.mrb[0].mxu0
        %v1903 = vadd.f32 %v1669, %v1902
        %v1904 = vpop.f32.mrb[0].mxu0
        %v1905 = vadd.f32 %v1669, %v1904
        %1906 = vdwg.mxu0
        %1907 = vmatprep.subr.mxu0 %v1634
        %1908 = vmatpush1.msra.mxu0 %v1633
        %1909 = vmatprep.subr.mxu0 %v1642
        %1910 = vmatpush1.msra.mxu0 %v1641
        %1911 = vmatprep.subr.mxu0 %v1650
        %1912 = vmatpush1.msra.mxu0 %v1649
        %1913 = vmatprep.subr.mxu0 %v1658
        %1914 = vmatpush1.msra.mxu0 %v1657
        %1915 = vmatprep.subr.mxu0 0.0
        %1916 = vmatpush1.msra.mxu0 0.0
        %1917 = vmatprep.subr.mxu0 0.0
        %1918 = vmatpush1.msra.mxu0 0.0
        %1919 = vmatprep.subr.mxu0 0.0
        %1920 = vmatpush1.msra.mxu0 0.0
        %1921 = vmatprep.subr.mxu0 0.0
        %1922 = vmatpush1.msra.mxu0 0.0
        %1923 = vmatprep.subr.mxu0 0.0
        %1924 = vmatpush1.msra.mxu0 0.0
        %1925 = vmatprep.subr.mxu0 0.0
        %1926 = vmatpush1.msra.mxu0 0.0
        %1927 = vmatprep.subr.mxu0 0.0
        %1928 = vmatpush1.msra.mxu0 0.0
        %1929 = vmatprep.subr.mxu0 0.0
        %1930 = vmatpush1.msra.mxu0 0.0
        %1931 = vmatprep.subr.mxu0 0.0
        %1932 = vmatpush1.msra.mxu0 0.0
        %1933 = vmatprep.subr.mxu0 0.0
        %1934 = vmatpush1.msra.mxu0 0.0
        %1935 = vmatprep.subr.mxu0 0.0
        %1936 = vmatpush1.msra.mxu0 0.0
        %1937 = vmatprep.subr.mxu0 0.0
        %1938 = vmatpush1.msra.mxu0 0.0
        %1939 = vmatprep.subr.mxu0 0.0
        %1940 = vmatpush1.msra.mxu0 0.0
        %1941 = vmatprep.subr.mxu0 0.0
        %1942 = vmatpush1.msra.mxu0 0.0
        %1943 = vmatprep.subr.mxu0 0.0
        %1944 = vmatpush1.msra.mxu0 0.0
        %1945 = vmatprep.subr.mxu0 0.0
        %1946 = vmatpush1.msra.mxu0 0.0
        %1947 = vmatprep.subr.mxu0 0.0
        %1948 = vmatpush1.msra.mxu0 0.0
        %1949 = vmatprep.subr.mxu0 0.0
        %1950 = vmatpush1.msra.mxu0 0.0
        %1951 = vmatprep.subr.mxu0 0.0
        %1952 = vmatpush1.msra.mxu0 0.0
        %1953 = vmatprep.subr.mxu0 0.0
        %1954 = vmatpush1.msra.mxu0 0.0
        %1955 = vmatprep.subr.mxu0 0.0
        %1956 = vmatpush1.msra.mxu0 0.0
        %1957 = vmatprep.subr.mxu0 0.0
        %1958 = vmatpush1.msra.mxu0 0.0
        %1959 = vmatprep.subr.mxu0 0.0
        %1960 = vmatpush1.msra.mxu0 0.0
        %1961 = vmatprep.subr.mxu0 0.0
        %1962 = vmatpush1.msra.mxu0 0.0
        %1963 = vmatprep.subr.mxu0 0.0
        %1964 = vmatpush1.msra.mxu0 0.0
        %1965 = vmatprep.subr.mxu0 0.0
        %1966 = vmatpush1.msra.mxu0 0.0
        %1967 = vmatprep.subr.mxu0 0.0
        %1968 = vmatpush1.msra.mxu0 0.0
        %1969 = vmatprep.subr.mxu0 0.0
        %1970 = vmatpush1.msra.mxu0 0.0
        %1971 = vmatprep.mubr.f32.mxu0 0.0
        %1972 = vmatmul.mubr.f32.gmra.mrb[0].mxu0 %v1672
        %v1973 = vpop.f32.mrb[0].mxu0
        %v1974 = vadd.f32 %v1664, %v1973
        %v1975 = vpop.f32.mrb[0].mxu0
        %v1976 = vadd.f32 %v1664, %v1975
        %1977 = vmatprep.mubr.f32.mxu0 0.0
        %1978 = vmatmul.mubr.f32.gmra.mrb[0].mxu0 %v1674
        %v1979 = vpop.f32.mrb[0].mxu0
        %v1980 = vadd.f32 %v1669, %v1979
        %v1981 = vpop.f32.mrb[0].mxu0
        %v1982 = vadd.f32 %v1669, %v1981
        %1983 = vdwg.mxu0
        %v1984 = vmax.f32 %v1743, 0.0
        %v1985 = vmax.f32 %v1745, 0.0
        %v1986 = vmax.f32 %v1820, 0.0
        %v1987 = vmax.f32 %v1822, 0.0
        %v1988 = vmax.f32 %v1897, 0.0
        %v1989 = vmax.f32 %v1899, 0.0
        %v1990 = vmax.f32 %v1974, 0.0
        %v1991 = vmax.f32 %v1976, 0.0
        %v1992 = vmax.f32 %v1749, 0.0
        %v1993 = vmax.f32 %v1751, 0.0
        %v1994 = vmax.f32 %v1826, 0.0
        %v1995 = vmax.f32 %v1828, 0.0
        %v1996 = vmax.f32 %v1903, 0.0
        %v1997 = vmax.f32 %v1905, 0.0
        %v1998 = vmax.f32 %v1980, 0.0
        %v1999 = vmax.f32 %v1982, 0.0
        %v2000 = vld [vmem:[%s1 + $0x70] sm:$0x1]
        %2002 = vset.pattern.permute.xlu0 127
        %2003 = vperm.xlu0 %2002, %v2000
        %v2004 = vpop.permute.xlu0 %2003
        %vm2006 = vcmask 130048
        %v2007 = vsel %vm2006, %v2000, 0
        %2009 = vmatprep.subr.mxu0 %v1985
        %2010 = vmatpush1.msra.mxu0 %v1984
        %2011 = vmatprep.subr.mxu0 %v1993
        %2012 = vmatpush1.msra.mxu0 %v1992
        %2013 = vmatprep.subr.mxu0 0.0
        %2014 = vmatpush1.msra.mxu0 0.0
        %2015 = vmatprep.subr.mxu0 0.0
        %2016 = vmatpush1.msra.mxu0 0.0
        %2017 = vmatprep.subr.mxu0 0.0
        %2018 = vmatpush1.msra.mxu0 0.0
        %2019 = vmatprep.subr.mxu0 0.0
        %2020 = vmatpush1.msra.mxu0 0.0
        %2021 = vmatprep.subr.mxu0 0.0
        %2022 = vmatpush1.msra.mxu0 0.0
        %2023 = vmatprep.subr.mxu0 0.0
        %2024 = vmatpush1.msra.mxu0 0.0
        %2025 = vmatprep.subr.mxu0 0.0
        %2026 = vmatpush1.msra.mxu0 0.0
        %2027 = vmatprep.subr.mxu0 0.0
        %2028 = vmatpush1.msra.mxu0 0.0
        %2029 = vmatprep.subr.mxu0 0.0
        %2030 = vmatpush1.msra.mxu0 0.0
        %2031 = vmatprep.subr.mxu0 0.0
        %2032 = vmatpush1.msra.mxu0 0.0
        %2033 = vmatprep.subr.mxu0 0.0
        %2034 = vmatpush1.msra.mxu0 0.0
        %2035 = vmatprep.subr.mxu0 0.0
        %2036 = vmatpush1.msra.mxu0 0.0
        %2037 = vmatprep.subr.mxu0 0.0
        %2038 = vmatpush1.msra.mxu0 0.0
        %2039 = vmatprep.subr.mxu0 0.0
        %2040 = vmatpush1.msra.mxu0 0.0
        %2041 = vmatprep.subr.mxu0 0.0
        %2042 = vmatpush1.msra.mxu0 0.0
        %2043 = vmatprep.subr.mxu0 0.0
        %2044 = vmatpush1.msra.mxu0 0.0
        %2045 = vmatprep.subr.mxu0 0.0
        %2046 = vmatpush1.msra.mxu0 0.0
        %2047 = vmatprep.subr.mxu0 0.0
        %2048 = vmatpush1.msra.mxu0 0.0
        %2049 = vmatprep.subr.mxu0 0.0
        %2050 = vmatpush1.msra.mxu0 0.0
        %2051 = vmatprep.subr.mxu0 0.0
        %2052 = vmatpush1.msra.mxu0 0.0
        %2053 = vmatprep.subr.mxu0 0.0
        %2054 = vmatpush1.msra.mxu0 0.0
        %2055 = vmatprep.subr.mxu0 0.0
        %2056 = vmatpush1.msra.mxu0 0.0
        %2057 = vmatprep.subr.mxu0 0.0
        %2058 = vmatpush1.msra.mxu0 0.0
        %2059 = vmatprep.subr.mxu0 0.0
        %2060 = vmatpush1.msra.mxu0 0.0
        %2061 = vmatprep.subr.mxu0 0.0
        %2062 = vmatpush1.msra.mxu0 0.0
        %2063 = vmatprep.subr.mxu0 0.0
        %2064 = vmatpush1.msra.mxu0 0.0
        %2065 = vmatprep.subr.mxu0 0.0
        %2066 = vmatpush1.msra.mxu0 0.0
        %2067 = vmatprep.subr.mxu0 0.0
        %2068 = vmatpush1.msra.mxu0 0.0
        %2069 = vmatprep.subr.mxu0 0.0
        %2070 = vmatpush1.msra.mxu0 0.0
        %2071 = vmatprep.subr.mxu0 0.0
        %2072 = vmatpush1.msra.mxu0 0.0
        %2073 = vmatprep.mubr.f32.mxu0 0.0
        %2074 = vmatmul.mubr.f32.gmra.mrb[0].mxu0 %v2007
        %v2075 = vpop.f32.mrb[0].mxu0
        %v2076 = vadd.f32 %v2004, %v2075
        %v2077 = vpop.f32.mrb[0].mxu0
        %v2078 = vadd.f32 %v2004, %v2077
        %2079 = vdwg.mxu0
        %2080 = vmatprep.subr.mxu0 %v1987
        %2081 = vmatpush1.msra.mxu0 %v1986
        %2082 = vmatprep.subr.mxu0 %v1995
        %2083 = vmatpush1.msra.mxu0 %v1994
        %2084 = vmatprep.subr.mxu0 0.0
        %2085 = vmatpush1.msra.mxu0 0.0
        %2086 = vmatprep.subr.mxu0 0.0
        %2087 = vmatpush1.msra.mxu0 0.0
        %2088 = vmatprep.subr.mxu0 0.0
        %2089 = vmatpush1.msra.mxu0 0.0
        %2090 = vmatprep.subr.mxu0 0.0
        %2091 = vmatpush1.msra.mxu0 0.0
        %2092 = vmatprep.subr.mxu0 0.0
        %2093 = vmatpush1.msra.mxu0 0.0
        %2094 = vmatprep.subr.mxu0 0.0
        %2095 = vmatpush1.msra.mxu0 0.0
        %2096 = vmatprep.subr.mxu0 0.0
        %2097 = vmatpush1.msra.mxu0 0.0
        %2098 = vmatprep.subr.mxu0 0.0
        %2099 = vmatpush1.msra.mxu0 0.0
        %2100 = vmatprep.subr.mxu0 0.0
        %2101 = vmatpush1.msra.mxu0 0.0
        %2102 = vmatprep.subr.mxu0 0.0
        %2103 = vmatpush1.msra.mxu0 0.0
        %2104 = vmatprep.subr.mxu0 0.0
        %2105 = vmatpush1.msra.mxu0 0.0
        %2106 = vmatprep.subr.mxu0 0.0
        %2107 = vmatpush1.msra.mxu0 0.0
        %2108 = vmatprep.subr.mxu0 0.0
        %2109 = vmatpush1.msra.mxu0 0.0
        %2110 = vmatprep.subr.mxu0 0.0
        %2111 = vmatpush1.msra.mxu0 0.0
        %2112 = vmatprep.subr.mxu0 0.0
        %2113 = vmatpush1.msra.mxu0 0.0
        %2114 = vmatprep.subr.mxu0 0.0
        %2115 = vmatpush1.msra.mxu0 0.0
        %2116 = vmatprep.subr.mxu0 0.0
        %2117 = vmatpush1.msra.mxu0 0.0
        %2118 = vmatprep.subr.mxu0 0.0
        %2119 = vmatpush1.msra.mxu0 0.0
        %2120 = vmatprep.subr.mxu0 0.0
        %2121 = vmatpush1.msra.mxu0 0.0
        %2122 = vmatprep.subr.mxu0 0.0
        %2123 = vmatpush1.msra.mxu0 0.0
        %2124 = vmatprep.subr.mxu0 0.0
        %2125 = vmatpush1.msra.mxu0 0.0
        %2126 = vmatprep.subr.mxu0 0.0
        %2127 = vmatpush1.msra.mxu0 0.0
        %2128 = vmatprep.subr.mxu0 0.0
        %2129 = vmatpush1.msra.mxu0 0.0
        %2130 = vmatprep.subr.mxu0 0.0
        %2131 = vmatpush1.msra.mxu0 0.0
        %2132 = vmatprep.subr.mxu0 0.0
        %2133 = vmatpush1.msra.mxu0 0.0
        %2134 = vmatprep.subr.mxu0 0.0
        %2135 = vmatpush1.msra.mxu0 0.0
        %2136 = vmatprep.subr.mxu0 0.0
        %2137 = vmatpush1.msra.mxu0 0.0
        %2138 = vmatprep.subr.mxu0 0.0
        %2139 = vmatpush1.msra.mxu0 0.0
        %2140 = vmatprep.subr.mxu0 0.0
        %2141 = vmatpush1.msra.mxu0 0.0
        %2142 = vmatprep.subr.mxu0 0.0
        %2143 = vmatpush1.msra.mxu0 0.0
        %2144 = vmatprep.mubr.f32.mxu0 0.0
        %2145 = vmatmul.mubr.f32.gmra.mrb[0].mxu0 %v2007
        %v2146 = vpop.f32.mrb[0].mxu0
        %v2147 = vadd.f32 %v2004, %v2146
        %v2148 = vpop.f32.mrb[0].mxu0
        %v2149 = vadd.f32 %v2004, %v2148
        %2150 = vdwg.mxu0
        %2151 = vmatprep.subr.mxu0 %v1989
        %2152 = vmatpush1.msra.mxu0 %v1988
        %2153 = vmatprep.subr.mxu0 %v1997
        %2154 = vmatpush1.msra.mxu0 %v1996
        %2155 = vmatprep.subr.mxu0 0.0
        %2156 = vmatpush1.msra.mxu0 0.0
        %2157 = vmatprep.subr.mxu0 0.0
        %2158 = vmatpush1.msra.mxu0 0.0
        %2159 = vmatprep.subr.mxu0 0.0
        %2160 = vmatpush1.msra.mxu0 0.0
        %2161 = vmatprep.subr.mxu0 0.0
        %2162 = vmatpush1.msra.mxu0 0.0
        %2163 = vmatprep.subr.mxu0 0.0
        %2164 = vmatpush1.msra.mxu0 0.0
        %2165 = vmatprep.subr.mxu0 0.0
        %2166 = vmatpush1.msra.mxu0 0.0
        %2167 = vmatprep.subr.mxu0 0.0
        %2168 = vmatpush1.msra.mxu0 0.0
        %2169 = vmatprep.subr.mxu0 0.0
        %2170 = vmatpush1.msra.mxu0 0.0
        %2171 = vmatprep.subr.mxu0 0.0
        %2172 = vmatpush1.msra.mxu0 0.0
        %2173 = vmatprep.subr.mxu0 0.0
        %2174 = vmatpush1.msra.mxu0 0.0
        %2175 = vmatprep.subr.mxu0 0.0
        %2176 = vmatpush1.msra.mxu0 0.0
        %2177 = vmatprep.subr.mxu0 0.0
        %2178 = vmatpush1.msra.mxu0 0.0
        %2179 = vmatprep.subr.mxu0 0.0
        %2180 = vmatpush1.msra.mxu0 0.0
        %2181 = vmatprep.subr.mxu0 0.0
        %2182 = vmatpush1.msra.mxu0 0.0
        %2183 = vmatprep.subr.mxu0 0.0
        %2184 = vmatpush1.msra.mxu0 0.0
        %2185 = vmatprep.subr.mxu0 0.0
        %2186 = vmatpush1.msra.mxu0 0.0
        %2187 = vmatprep.subr.mxu0 0.0
        %2188 = vmatpush1.msra.mxu0 0.0
        %2189 = vmatprep.subr.mxu0 0.0
        %2190 = vmatpush1.msra.mxu0 0.0
        %2191 = vmatprep.subr.mxu0 0.0
        %2192 = vmatpush1.msra.mxu0 0.0
        %2193 = vmatprep.subr.mxu0 0.0
        %2194 = vmatpush1.msra.mxu0 0.0
        %2195 = vmatprep.subr.mxu0 0.0
        %2196 = vmatpush1.msra.mxu0 0.0
        %2197 = vmatprep.subr.mxu0 0.0
        %2198 = vmatpush1.msra.mxu0 0.0
        %2199 = vmatprep.subr.mxu0 0.0
        %2200 = vmatpush1.msra.mxu0 0.0
        %2201 = vmatprep.subr.mxu0 0.0
        %2202 = vmatpush1.msra.mxu0 0.0
        %2203 = vmatprep.subr.mxu0 0.0
        %2204 = vmatpush1.msra.mxu0 0.0
        %2205 = vmatprep.subr.mxu0 0.0
        %2206 = vmatpush1.msra.mxu0 0.0
        %2207 = vmatprep.subr.mxu0 0.0
        %2208 = vmatpush1.msra.mxu0 0.0
        %2209 = vmatprep.subr.mxu0 0.0
        %2210 = vmatpush1.msra.mxu0 0.0
        %2211 = vmatprep.subr.mxu0 0.0
        %2212 = vmatpush1.msra.mxu0 0.0
        %2213 = vmatprep.subr.mxu0 0.0
        %2214 = vmatpush1.msra.mxu0 0.0
        %2215 = vmatprep.mubr.f32.mxu0 0.0
        %2216 = vmatmul.mubr.f32.gmra.mrb[0].mxu0 %v2007
        %v2217 = vpop.f32.mrb[0].mxu0
        %v2218 = vadd.f32 %v2004, %v2217
        %v2219 = vpop.f32.mrb[0].mxu0
        %v2220 = vadd.f32 %v2004, %v2219
        %2221 = vdwg.mxu0
        %2222 = vmatprep.subr.mxu0 %v1991
        %2223 = vmatpush1.msra.mxu0 %v1990
        %2224 = vmatprep.subr.mxu0 %v1999
        %2225 = vmatpush1.msra.mxu0 %v1998
        %2226 = vmatprep.subr.mxu0 0.0
        %2227 = vmatpush1.msra.mxu0 0.0
        %2228 = vmatprep.subr.mxu0 0.0
        %2229 = vmatpush1.msra.mxu0 0.0
        %2230 = vmatprep.subr.mxu0 0.0
        %2231 = vmatpush1.msra.mxu0 0.0
        %2232 = vmatprep.subr.mxu0 0.0
        %2233 = vmatpush1.msra.mxu0 0.0
        %2234 = vmatprep.subr.mxu0 0.0
        %2235 = vmatpush1.msra.mxu0 0.0
        %2236 = vmatprep.subr.mxu0 0.0
        %2237 = vmatpush1.msra.mxu0 0.0
        %2238 = vmatprep.subr.mxu0 0.0
        %2239 = vmatpush1.msra.mxu0 0.0
        %2240 = vmatprep.subr.mxu0 0.0
        %2241 = vmatpush1.msra.mxu0 0.0
        %2242 = vmatprep.subr.mxu0 0.0
        %2243 = vmatpush1.msra.mxu0 0.0
        %2244 = vmatprep.subr.mxu0 0.0
        %2245 = vmatpush1.msra.mxu0 0.0
        %2246 = vmatprep.subr.mxu0 0.0
        %2247 = vmatpush1.msra.mxu0 0.0
        %2248 = vmatprep.subr.mxu0 0.0
        %2249 = vmatpush1.msra.mxu0 0.0
        %2250 = vmatprep.subr.mxu0 0.0
        %2251 = vmatpush1.msra.mxu0 0.0
        %2252 = vmatprep.subr.mxu0 0.0
        %2253 = vmatpush1.msra.mxu0 0.0
        %2254 = vmatprep.subr.mxu0 0.0
        %2255 = vmatpush1.msra.mxu0 0.0
        %2256 = vmatprep.subr.mxu0 0.0
        %2257 = vmatpush1.msra.mxu0 0.0
        %2258 = vmatprep.subr.mxu0 0.0
        %2259 = vmatpush1.msra.mxu0 0.0
        %2260 = vmatprep.subr.mxu0 0.0
        %2261 = vmatpush1.msra.mxu0 0.0
        %2262 = vmatprep.subr.mxu0 0.0
        %2263 = vmatpush1.msra.mxu0 0.0
        %2264 = vmatprep.subr.mxu0 0.0
        %2265 = vmatpush1.msra.mxu0 0.0
        %2266 = vmatprep.subr.mxu0 0.0
        %2267 = vmatpush1.msra.mxu0 0.0
        %2268 = vmatprep.subr.mxu0 0.0
        %2269 = vmatpush1.msra.mxu0 0.0
        %2270 = vmatprep.subr.mxu0 0.0
        %2271 = vmatpush1.msra.mxu0 0.0
        %2272 = vmatprep.subr.mxu0 0.0
        %2273 = vmatpush1.msra.mxu0 0.0
        %2274 = vmatprep.subr.mxu0 0.0
        %2275 = vmatpush1.msra.mxu0 0.0
        %2276 = vmatprep.subr.mxu0 0.0
        %2277 = vmatpush1.msra.mxu0 0.0
        %2278 = vmatprep.subr.mxu0 0.0
        %2279 = vmatpush1.msra.mxu0 0.0
        %2280 = vmatprep.subr.mxu0 0.0
        %2281 = vmatpush1.msra.mxu0 0.0
        %2282 = vmatprep.subr.mxu0 0.0
        %2283 = vmatpush1.msra.mxu0 0.0
        %2284 = vmatprep.subr.mxu0 0.0
        %2285 = vmatpush1.msra.mxu0 0.0
        %2286 = vmatprep.mubr.f32.mxu0 0.0
        %2287 = vmatmul.mubr.f32.gmra.mrb[0].mxu0 %v2007
        %v2288 = vpop.f32.mrb[0].mxu0
        %v2289 = vadd.f32 %v2004, %v2288
        %v2290 = vpop.f32.mrb[0].mxu0
        %v2291 = vadd.f32 %v2004, %v2290
        %2292 = vdwg.mxu0
        %v2301 = vcombine.low %v2076, %v2078
        %v2302 = vcombine.low %v2147, %v2149
        %v2303 = vcombine.low %v2218, %v2220
        %v2304 = vcombine.low %v2289, %v2291
        %v2306 = vunpack.c.l.s4 1966171168
        %v2307 = vunpack.c.0.s8 %v2306
        %v2308 = vlaneseq
        %v2309 = vshrl.u32 %v2308, 7
        %v2310 = vsub.s32 %v2307, %v2309
        %v2311 = vrot.slane %v2301, %v2310
        %v2313 = vunpack.c.l.s4 1966171168
        %v2314 = vunpack.c.0.s8 %v2313
        %v2315 = vlaneseq
        %v2316 = vshrl.u32 %v2315, 7
        %v2317 = vsub.s32 %v2314, %v2316
        %v2318 = vrot.slane %v2302, %v2317
        %v2320 = vunpack.c.l.s4 1966171168
        %v2321 = vunpack.c.0.s8 %v2320
        %v2322 = vlaneseq
        %v2323 = vshrl.u32 %v2322, 7
        %v2324 = vsub.s32 %v2321, %v2323
        %v2325 = vrot.slane %v2303, %v2324
        %v2327 = vunpack.c.l.s4 1966171168
        %v2328 = vunpack.c.0.s8 %v2327
        %v2329 = vlaneseq
        %v2330 = vshrl.u32 %v2329, 7
        %v2331 = vsub.s32 %v2328, %v2330
        %v2332 = vrot.slane %v2304, %v2331
        %v2333 = vcombine.low %v2311, %v2318
        %v2334 = vcombine.low %v2325, %v2332
        %v2336 = vunpack.c.l.s4 1966171168
        %v2337 = vunpack.c.0.s8 %v2336
        %v2338 = vlaneseq
        %v2339 = vshrl.u32 %v2338, 7
        %v2340 = vsub.s32 %v2337, %v2339
        %v2341 = vrot.slane %v2333, %v2340
        %v2343 = vunpack.c.l.s4 1966171168
        %v2344 = vunpack.c.0.s8 %v2343
        %v2345 = vlaneseq
        %v2346 = vshrl.u32 %v2345, 7
        %v2347 = vsub.s32 %v2344, %v2346
        %v2348 = vrot.slane %v2334, %v2347
        %v2349 = vcombine.low %v2341, %v2348
        %2351 = vst [vmem:[%s137] sm:$0xff] %v2349
        %s2352 = sand.u32 %s71, 1
        %s2353 = scalar_lea.sflag [#allocation3], %s2352
        %s2354 = sand.u32 %s71, 1
        %s2355 = smul.addr %s2354, 8
        %s2356 = scalar_lea.vmem [#allocation2], %s2355
        // Predicated region
        $region29: #{tpu_custom_call.1} parent=27 // pred_check
          %p2357 = pneg %p81
        $region30: #{tpu_custom_call.1} parent=27 // pred_check_branch
          %2359 = sbr.rel (%p2357) target = $region32
        $region31: #{tpu_custom_call.1} parent=27 // pred_region
          %s2360 = smul.u32 8, %s16
          %s2362 = ssub.s32 128, 128
          %2363 = vsyncadd %s2353, %s2362
          %s2364 = smul.addr %s2360, 16
          %s2365 = scalar_lea.hbm %s2, %s2364
          %s2367 = sshll.u32 %s2356, 4
          %s2368 = int_to_ptr.vmem [resolvable:$true] %s2367
          %2370 = dma.vmem_to_hbm [thread:$0]  %s2368, 128, %s2365, %s2353
        $region32: #{tpu_custom_call.1} parent=27 // pred_fallthru
          _
      $region28: #{tpu_custom_call.1} parent=5 // pred_fallthru
        _
      %p2371 = scmp.le.s32.totalorder 2, %s11
      // Predicated region
      $region33: #{tpu_custom_call.1} parent=5 // pred_check
        %p2372 = pneg %p2371
      $region34: #{tpu_custom_call.1} parent=5 // pred_check_branch
        %2374 = sbr.rel (%p2372) target = $region36
      $region35: #{tpu_custom_call.1} parent=5 // pred_region
        %s2375 = ssub.s32 %s11, 2
        // Predicated region
        $region37: #{tpu_custom_call.1} parent=35 // pred_check
          %p2376 = pneg %p87
        $region38: #{tpu_custom_call.1} parent=35 // pred_check_branch
          %2378 = sbr.rel (%p2376) target = $region40
        $region39: #{tpu_custom_call.1} parent=35 // pred_region
          %s2379 = sand.u32 %s72, 1
          %s2380 = scalar_lea.sflag [#allocation3], %s2379
          %s2381 = sand.u32 %s72, 1
          %s2382 = smul.addr %s2381, 8
          %s2383 = scalar_lea.vmem [#allocation2], %s2382
          %2384 = dma.done %s2380, 128
        $region40: #{tpu_custom_call.1} parent=35 // pred_fallthru
          _
      $region36: #{tpu_custom_call.1} parent=5 // pred_fallthru
        _
    $region6: #{tpu_custom_call.1} parent=1 // loop_footer
      %s15 = sadd.s32 1, %s11
    $region7: #{tpu_custom_call.1} parent=1 // loop_footer_branch
      %10 = sbr.rel target = $region3
    $region8: #{tpu_custom_call.1} parent=1 // loop_exit
      _
    %2385 = vsyncpa [#allocation3], 1
    %s2386 = scalar_lea.sflag [#allocation3], 1
    %2387 = vsyncpa %s2386, 1

</llo_original>
